<compile_context>
chip_gen: v7x
topology: tpu7x:2x2x1
jax: 0.10.0
libtpu: 0.0.40
codegen_flags: <defaults>
</compile_context>

<pallas_src>
import functools

import jax
import jax.numpy as jnp
from jax import lax
from jax.experimental import pallas as pl
from jax.experimental.pallas import tpu as pltpu


def _tpu_vmem_capacity_bytes():
    """Physical VMEM per TensorCore; conservative fallback if the query fails."""
    try:
        return int(pltpu.get_tpu_info().vmem_capacity_bytes)
    except Exception:
        return 64 << 20  # v7x per-TC VMEM (smallest of the supported gens)


def _estimate_vmem_bytes(tq, N, C, inner, dim_out, heads, attn_itemsize, with_attn):
    """Count everything resident in VMEM for one (batch, query-tile) step."""
    f32 = 4
    kv_scratch = 2 * inner * N * f32                       # persistent KV scratch
    x_blk = 2 * C * N * f32                                # double-buffered x block
    out_blk = 2 * dim_out * tq * f32                       # double-buffered out block
    attn_blk = (2 * heads * tq * N * attn_itemsize) if with_attn else 0
    weights = 2 * (inner * C + 2 * inner * C + dim_out * inner + dim_out) * f32
    temps = 4 * tq * N * f32                               # dots / exp / attn working set (+slack)
    return kv_scratch + x_blk + out_blk + attn_blk + weights + temps


def _pick_query_tile(N, C, inner, dim_out, heads, attn_itemsize, with_attn, budget):
    """Largest multiple-of-128 query tile dividing N whose full VMEM footprint
    fits the budget; small / irregular maps fall back to a single tile."""
    if N % 128 != 0:
        return N
    best = 128
    t = 128
    while t <= N:
        if (N % t == 0 and
                _estimate_vmem_bytes(t, N, C, inner, dim_out, heads,
                                     attn_itemsize, with_attn) <= budget):
            best = t
        t += 128
    return best


def attention2d_kernel(x_ref, wq_ref, wkv_ref, wo_ref, bo_ref, *rest,
                       heads, dim_head, tq, dim_out, with_attn):
    """One (batch, query-tile) grid step.

    x_ref:    (1, C, N)          all pixels of this batch element
    wq_ref:   (inner, C)         Q projection (softmax scale pre-folded)
    wkv_ref:  (2*inner, C)       fused K+V projection
    wo_ref:   (dim_out, inner)   to_out 1x1 conv weight
    bo_ref:   (dim_out, 1)       to_out bias
    out_ref:  (1, dim_out, tq)
    attn_ref: (1, heads, tq, N)  (only when with_attn)
    kv_ref:   (2*inner, N) f32   persistent scratch, valid for the whole batch element
    """
    if with_attn:
        out_ref, attn_ref, kv_ref = rest
    else:
        out_ref, kv_ref = rest
        attn_ref = None

    qi = pl.program_id(1)

    # K/V projection: once per batch element (qi axis is "arbitrary"/sequential).
    @pl.when(qi == 0)
    def _():
        kv_ref[...] = jnp.dot(wkv_ref[...], x_ref[0],
                              preferred_element_type=jnp.float32)   # (2*inner, N)

    # Query columns sliced from the resident x block (no second input stream).
    q_start = pl.multiple_of(qi * tq, tq)
    x_q = x_ref[0, :, pl.ds(q_start, tq)]                           # (C, tq)
    q_all = jnp.dot(wq_ref[...], x_q,
                    preferred_element_type=jnp.float32)             # (inner, tq)

    out_acc = jnp.zeros((dim_out, tq), jnp.float32)
    for h in range(heads):                                          # static unroll
        q = q_all[h * dim_head:(h + 1) * dim_head]                  # (d, tq)
        k = kv_ref[h * dim_head:(h + 1) * dim_head, :]              # (d, N)
        v = kv_ref[(heads + h) * dim_head:
                   (heads + h + 1) * dim_head, :]                   # (d, N)

        # dots[i, j] = sum_d q[d, i] * k[d, j]  (scale already folded into Wq)
        dots = lax.dot_general(q, k, (((0,), (0,)), ((), ())),
                               preferred_element_type=jnp.float32)  # (tq, N)

        m = jnp.max(dots, axis=-1, keepdims=True)
        e = jnp.exp(dots - m)
        denom = jnp.sum(e, axis=-1, keepdims=True)                  # (tq, 1), >= 1
        inv = pl.reciprocal(denom, approx=True)                     # EUP slot
        inv = inv * (2.0 - denom * inv)                             # 1 NR step: ~exact
        attn = e * inv                                              # (tq, N), f32

        if with_attn:
            attn_ref[0, h] = attn.astype(attn_ref.dtype)            # bf16/f32 store

        # o_h[d, i] = sum_j v[d, j] * attn[i, j]
        o_h = lax.dot_general(v, attn, (((1,), (1,)), ((), ())),
                              preferred_element_type=jnp.float32)   # (d, tq)
        # Fold the output projection per head (no concat, short live ranges).
        out_acc = out_acc + jnp.dot(wo_ref[:, h * dim_head:(h + 1) * dim_head],
                                    o_h, preferred_element_type=jnp.float32)

    out_ref[0] = (out_acc + bo_ref[...]).astype(out_ref.dtype)


def attention2d_forward(x_nchw, wq, wk, wv, wo, bo, *, heads, dim_head,
                        tq=None, attn_dtype=jnp.bfloat16, return_attn=True):
    """x_nchw: (b, C_in, H, W) float32.  Returns (out_nchw, attn) like the
    PyTorch module (k=1): out (b, dim_out, H, W) f32, attn (b, heads, N, N) in
    `attn_dtype` (bf16 default, f32 optional), or attn=None if return_attn=False."""
    b, c, H, W = x_nchw.shape
    N = H * W
    dim_out, inner = wo.shape
    assert inner == heads * dim_head
    scale = dim_head ** (-0.5)

    xf = x_nchw.reshape(b, c, N)                  # NCHW flattened; no transpose
    wq_s = wq * scale                             # fold softmax scale into Wq
    wkv = jnp.concatenate([wk, wv], axis=0)       # fused K/V projection weight
    bo2 = bo.reshape(dim_out, 1)

    attn_itemsize = jnp.dtype(attn_dtype).itemsize
    vmem_cap = _tpu_vmem_capacity_bytes()
    budget = int(vmem_cap * 0.70)                 # headroom for compiler temporaries

    if tq is None:
        tq = _pick_query_tile(N, c, inner, dim_out, heads,
                              attn_itemsize, return_attn, budget)
    assert N % tq == 0, "query tile must divide H*W"
    nq = N // tq

    est = _estimate_vmem_bytes(tq, N, c, inner, dim_out, heads,
                               attn_itemsize, return_attn)
    vmem_limit = int(min(max(2 * est, 32 << 20), int(vmem_cap * 0.75)))

    kernel = functools.partial(attention2d_kernel, heads=heads, dim_head=dim_head,
                               tq=tq, dim_out=dim_out, with_attn=return_attn)

    in_specs = [
        pl.BlockSpec((1, c, N), lambda bi, qi: (bi, 0, 0)),          # x (resident per batch)
        pl.BlockSpec((inner, c), lambda bi, qi: (0, 0)),             # Wq (resident)
        pl.BlockSpec((2 * inner, c), lambda bi, qi: (0, 0)),         # Wkv (resident)
        pl.BlockSpec((dim_out, inner), lambda bi, qi: (0, 0)),       # Wo (resident)
        pl.BlockSpec((dim_out, 1), lambda bi, qi: (0, 0)),           # bias (resident)
    ]
    out_spec_o = pl.BlockSpec((1, dim_out, tq), lambda bi, qi: (bi, 0, qi))
    if return_attn:
        out_shape = (jax.ShapeDtypeStruct((b, dim_out, N), jnp.float32),
                     jax.ShapeDtypeStruct((b, heads, N, N), attn_dtype))
        out_specs = (out_spec_o,
                     pl.BlockSpec((1, heads, tq, N), lambda bi, qi: (bi, 0, qi, 0)))
    else:
        out_shape = jax.ShapeDtypeStruct((b, dim_out, N), jnp.float32)
        out_specs = out_spec_o

    result = pl.pallas_call(
        kernel,
        out_shape=out_shape,
        grid=(b, nq),
        in_specs=in_specs,
        out_specs=out_specs,
        scratch_shapes=[pltpu.VMEM((2 * inner, N), jnp.float32)],    # persistent KV
        compiler_params=pltpu.CompilerParams(
            # qi MUST be "arbitrary": the KV scratch is reused across query tiles.
            dimension_semantics=("parallel", "arbitrary"),
            vmem_limit_bytes=vmem_limit),
    )(xf, wq_s, wkv, wo, bo2)

    if return_attn:
        out_cn, attn = result
        return out_cn.reshape(b, dim_out, H, W), attn
    return result.reshape(b, dim_out, H, W), None


def attention2d_reference(x_nchw, wq, wk, wv, wo, bo, *, heads, dim_head):
    """Plain-JAX reference matching the PyTorch forward (k=1)."""
    b, c, H, W = x_nchw.shape
    N = H * W
    dim_out = wo.shape[0]
    scale = dim_head ** (-0.5)
    xf = jnp.transpose(x_nchw, (0, 2, 3, 1)).reshape(b, N, c)          # (b,N,C)
    q = jnp.einsum('bnc,oc->bno', xf, wq).reshape(b, N, heads, dim_head)
    k = jnp.einsum('bnc,oc->bno', xf, wk).reshape(b, N, heads, dim_head)
    v = jnp.einsum('bnc,oc->bno', xf, wv).reshape(b, N, heads, dim_head)
    q, k, v = (jnp.transpose(t, (0, 2, 1, 3)) for t in (q, k, v))      # (b,h,N,d)
    dots = jnp.einsum('bhid,bhjd->bhij', q, k) * scale
    attn = jax.nn.softmax(dots, axis=-1)
    o = jnp.einsum('bhij,bhjd->bhid', attn, v)                         # (b,h,N,d)
    o = jnp.transpose(o, (0, 2, 1, 3)).reshape(b, N, heads * dim_head)
    out = jnp.einsum('bni,oi->bno', o, wo) + bo[None, None, :]
    out = jnp.transpose(out.reshape(b, H, W, dim_out), (0, 3, 1, 2))
    return out, attn


if __name__ == "__main__":
    # small, module-consistent shapes
    batch, dim_in, H, W = 2, 4, 16, 16
    heads, dim_head = 2, 8
    inner = heads * dim_head
    dim_out = dim_in  # module default (dim_out=None)

    key = jax.random.PRNGKey(0)
    kx, kq, kkv, ko, kb = jax.random.split(key, 5)

    x = jax.random.normal(kx, (batch, dim_in, H, W), dtype=jnp.float32)
    # conv weights (1x1) squeezed to (out_ch, in_ch); deterministic init
    wq = jax.random.normal(kq, (inner, dim_in), dtype=jnp.float32) * 0.1
    wkv_full = jax.random.normal(kkv, (2 * inner, dim_in), dtype=jnp.float32) * 0.1
    wk, wv = wkv_full[:inner], wkv_full[inner:]                        # chunk(2, dim=1)
    wo = jax.random.normal(ko, (dim_out, inner), dtype=jnp.float32) * 0.1
    bo = jax.random.normal(kb, (dim_out,), dtype=jnp.float32) * 0.1

    ref_out, ref_attn = attention2d_reference(x, wq, wk, wv, wo, bo,
                                              heads=heads, dim_head=dim_head)

    # 1) multi-tile query grid (tq=128 -> 2 query tiles), bf16 attn (default)
    out, attn = attention2d_forward(x, wq, wk, wv, wo, bo,
                                    heads=heads, dim_head=dim_head, tq=128)
    out = jax.block_until_ready(out)
    attn = jax.block_until_ready(attn)
    assert out.shape == (batch, dim_out, H, W)
    assert attn.shape == (batch, heads, H * W, H * W)
    assert attn.dtype == jnp.bfloat16
    assert jnp.allclose(out, ref_out, rtol=1e-4, atol=1e-4)
    assert jnp.allclose(attn.astype(jnp.float32), ref_attn, rtol=1e-2, atol=1e-2)

    # 2) auto-picked tile + full-precision attn output
    out2, attn2 = attention2d_forward(x, wq, wk, wv, wo, bo,
                                      heads=heads, dim_head=dim_head,
                                      attn_dtype=jnp.float32)
    out2 = jax.block_until_ready(out2)
    attn2 = jax.block_until_ready(attn2)
    assert jnp.allclose(out2, ref_out, rtol=1e-4, atol=1e-4)
    assert jnp.allclose(attn2, ref_attn, rtol=1e-4, atol=1e-4)

    # 3) attn writeback skipped entirely (caller doesn't need the map)
    out3, attn3 = attention2d_forward(x, wq, wk, wv, wo, bo,
                                      heads=heads, dim_head=dim_head, tq=128,
                                      return_attn=False)
    out3 = jax.block_until_ready(out3)
    assert attn3 is None
    assert jnp.allclose(out3, ref_out, rtol=1e-4, atol=1e-4)

    print("KERNEL_OK")
</pallas_src>

<mosaic_0001>
module attributes {stable_mosaic.version = 11 : i64} {
  func.func @attention2d_kernel(%arg0: i32, %arg1: i32, %arg2: memref<1x4x256xf32, #tpu.memory_space<vmem>>, %arg3: memref<16x4xf32, #tpu.memory_space<vmem>>, %arg4: memref<32x4xf32, #tpu.memory_space<vmem>>, %arg5: memref<4x16xf32, #tpu.memory_space<vmem>>, %arg6: memref<4x1xf32, #tpu.memory_space<vmem>>, %arg7: memref<1x4x128xf32, #tpu.memory_space<vmem>>, %arg8: memref<1x2x128x256xbf16, #tpu.memory_space<vmem>>, %arg9: memref<32x256xf32, #tpu.memory_space<vmem>>) attributes {dimension_semantics = [#tpu.dimension_semantics<parallel>, #tpu.dimension_semantics<arbitrary>], iteration_bounds = array<i64: 2, 2>, scalar_prefetch = 0 : i64, scratch_operands = 1 : i64, tpu.core_type = #tpu.core_type<tc>, window_params = [{transform_indices = @transform_0, window_bounds = array<i64: 1, 4, 256>}, {pipeline_mode = #tpu.pipeline_mode<synchronous>, transform_indices = @transform_1, window_bounds = array<i64: 16, 4>}, {pipeline_mode = #tpu.pipeline_mode<synchronous>, transform_indices = @transform_2, window_bounds = array<i64: 32, 4>}, {pipeline_mode = #tpu.pipeline_mode<synchronous>, transform_indices = @transform_3, window_bounds = array<i64: 4, 16>}, {pipeline_mode = #tpu.pipeline_mode<synchronous>, transform_indices = @transform_4, window_bounds = array<i64: 4, 1>}, {transform_indices = @transform_5, window_bounds = array<i64: 1, 4, 128>}, {transform_indices = @transform_6, window_bounds = array<i64: 1, 2, 128, 256>}]} {
    %c0_i32 = arith.constant 0 : i32
    %0 = arith.cmpi eq, %arg1, %c0_i32 : i32
    %1 = arith.extui %0 : i1 to i32
    %c0_i32_0 = arith.constant 0 : i32
    %2 = arith.cmpi ne, %1, %c0_i32_0 : i32
    scf.if %2 {
      %c0_38 = arith.constant 0 : index
      %c0_39 = arith.constant 0 : index
      %69 = vector.load %arg4[%c0_38, %c0_39] : memref<32x4xf32, #tpu.memory_space<vmem>>, vector<32x4xf32>
      %c0_40 = arith.constant 0 : index
      %c0_41 = arith.constant 0 : index
      %c0_42 = arith.constant 0 : index
      %70 = vector.load %arg2[%c0_40, %c0_41, %c0_42] : memref<1x4x256xf32, #tpu.memory_space<vmem>>, vector<1x4x256xf32>
      %71 = vector.shape_cast %70 : vector<1x4x256xf32> to vector<4x256xf32>
      %cst_43 = arith.constant dense<0.000000e+00> : vector<32x256xf32>
      %72 = tpu.matmul %69, %71, %cst_43 {dimension_numbers = #tpu.dot_dimension_numbers<[1], [0], [0], [1], [0, 0, 1, 1], [], []>} : vector<32x4xf32>, vector<4x256xf32>, vector<32x256xf32> -> vector<32x256xf32>
      %c0_44 = arith.constant 0 : index
      %c0_45 = arith.constant 0 : index
      %73 = vector.load %arg9[%c0_44, %c0_45] : memref<32x256xf32, #tpu.memory_space<vmem>>, vector<32x256xf32>
      tpu.vector_store %arg9[%c0_44, %c0_45], %72 {strides = array<i32>} : memref<32x256xf32, #tpu.memory_space<vmem>>, vector<32x256xf32>,
    } else {
    }
    %c128_i32 = arith.constant 128 : i32
    %3 = arith.muli %arg1, %c128_i32 : i32
    %4 = tpu.assume_multiple %3, 128 : i32
    %c0 = arith.constant 0 : index
    %c0_1 = arith.constant 0 : index
    %5 = arith.index_cast %4 : i32 to index
    %6 = vector.load %arg2[%c0, %c0_1, %5] : memref<1x4x256xf32, #tpu.memory_space<vmem>>, vector<1x4x128xf32>
    %7 = vector.shape_cast %6 : vector<1x4x128xf32> to vector<4x128xf32>
    %c0_2 = arith.constant 0 : index
    %c0_3 = arith.constant 0 : index
    %8 = vector.load %arg3[%c0_2, %c0_3] : memref<16x4xf32, #tpu.memory_space<vmem>>, vector<16x4xf32>
    %cst = arith.constant dense<0.000000e+00> : vector<16x128xf32>
    %9 = tpu.matmul %8, %7, %cst {dimension_numbers = #tpu.dot_dimension_numbers<[1], [0], [0], [1], [0, 0, 1, 1], [], []>} : vector<16x4xf32>, vector<4x128xf32>, vector<16x128xf32> -> vector<16x128xf32>
    %cst_4 = arith.constant 0.000000e+00 : f32
    %10 = vector.broadcast %cst_4 : f32 to vector<4x128xf32>
    %11 = vector.extract_strided_slice %9 {offsets = [0, 0], sizes = [8, 128], strides = [1, 1]} : vector<16x128xf32> to vector<8x128xf32>
    %c0_5 = arith.constant 0 : index
    %c0_6 = arith.constant 0 : index
    %12 = vector.load %arg9[%c0_5, %c0_6] : memref<32x256xf32, #tpu.memory_space<vmem>>, vector<8x256xf32>
    %c16 = arith.constant 16 : index
    %c0_7 = arith.constant 0 : index
    %13 = vector.load %arg9[%c16, %c0_7] : memref<32x256xf32, #tpu.memory_space<vmem>>, vector<8x256xf32>
    %cst_8 = arith.constant dense<0.000000e+00> : vector<128x256xf32>
    %14 = tpu.matmul %11, %12, %cst_8 {dimension_numbers = #tpu.dot_dimension_numbers<[0], [0], [1], [1], [0, 1, 1, 1], [], []>} : vector<8x128xf32>, vector<8x256xf32>, vector<128x256xf32> -> vector<128x256xf32>
    %cst_9 = arith.constant dense<0xFF800000> : vector<128xf32>
    %15 = vector.multi_reduction <maximumf>, %14, %cst_9 [1] : vector<128x256xf32> to vector<128xf32>
    %16 = vector.shape_cast %15 : vector<128xf32> to vector<128x1xf32>
    %17 = vector.broadcast %16 : vector<128x1xf32> to vector<128x256xf32>
    %18 = arith.subf %14, %17 : vector<128x256xf32>
    %19 = math.exp %18 : vector<128x256xf32>
    %cst_10 = arith.constant dense<0.000000e+00> : vector<128xf32>
    %20 = vector.multi_reduction <add>, %19, %cst_10 [1] : vector<128x256xf32> to vector<128xf32>
    %21 = vector.shape_cast %20 : vector<128xf32> to vector<128x1xf32>
    %22 = tpu.reciprocal %21 {approx = true} : vector<128x1xf32> -> vector<128x1xf32>
    %23 = arith.mulf %21, %22 : vector<128x1xf32>
    %cst_11 = arith.constant 2.000000e+00 : f32
    %24 = vector.broadcast %cst_11 : f32 to vector<128x1xf32>
    %25 = arith.subf %24, %23 : vector<128x1xf32>
    %26 = arith.mulf %22, %25 : vector<128x1xf32>
    %27 = vector.broadcast %26 : vector<128x1xf32> to vector<128x256xf32>
    %28 = arith.mulf %19, %27 : vector<128x256xf32>
    %29 = arith.truncf %28 : vector<128x256xf32> to vector<128x256xbf16>
    %c0_12 = arith.constant 0 : index
    %c0_13 = arith.constant 0 : index
    %c0_14 = arith.constant 0 : index
    %c0_15 = arith.constant 0 : index
    %30 = vector.load %arg8[%c0_12, %c0_13, %c0_14, %c0_15] : memref<1x2x128x256xbf16, #tpu.memory_space<vmem>>, vector<1x1x128x256xbf16>
    %31 = vector.shape_cast %30 : vector<1x1x128x256xbf16> to vector<128x256xbf16>
    %32 = vector.shape_cast %29 : vector<128x256xbf16> to vector<1x1x128x256xbf16>
    tpu.vector_store %arg8[%c0_12, %c0_13, %c0_14, %c0_15], %32 {strides = array<i32>} : memref<1x2x128x256xbf16, #tpu.memory_space<vmem>>, vector<1x1x128x256xbf16>,
    %cst_16 = arith.constant dense<0.000000e+00> : vector<8x128xf32>
    %33 = tpu.matmul %13, %28, %cst_16 {dimension_numbers = #tpu.dot_dimension_numbers<[1], [1], [0], [0], [0, 0, 1, 0], [], []>} : vector<8x256xf32>, vector<128x256xf32>, vector<8x128xf32> -> vector<8x128xf32>
    %c0_17 = arith.constant 0 : index
    %c0_18 = arith.constant 0 : index
    %34 = vector.load %arg5[%c0_17, %c0_18] : memref<4x16xf32, #tpu.memory_space<vmem>>, vector<4x8xf32>
    %cst_19 = arith.constant dense<0.000000e+00> : vector<4x128xf32>
    %35 = tpu.matmul %34, %33, %cst_19 {dimension_numbers = #tpu.dot_dimension_numbers<[1], [0], [0], [1], [0, 0, 1, 1], [], []>} : vector<4x8xf32>, vector<8x128xf32>, vector<4x128xf32> -> vector<4x128xf32>
    %36 = arith.addf %10, %35 : vector<4x128xf32>
    %37 = vector.extract_strided_slice %9 {offsets = [8, 0], sizes = [8, 128], strides = [1, 1]} : vector<16x128xf32> to vector<8x128xf32>
    %c8 = arith.constant 8 : index
    %c0_20 = arith.constant 0 : index
    %38 = vector.load %arg9[%c8, %c0_20] : memref<32x256xf32, #tpu.memory_space<vmem>>, vector<8x256xf32>
    %c24 = arith.constant 24 : index
    %c0_21 = arith.constant 0 : index
    %39 = vector.load %arg9[%c24, %c0_21] : memref<32x256xf32, #tpu.memory_space<vmem>>, vector<8x256xf32>
    %cst_22 = arith.constant dense<0.000000e+00> : vector<128x256xf32>
    %40 = tpu.matmul %37, %38, %cst_22 {dimension_numbers = #tpu.dot_dimension_numbers<[0], [0], [1], [1], [0, 1, 1, 1], [], []>} : vector<8x128xf32>, vector<8x256xf32>, vector<128x256xf32> -> vector<128x256xf32>
    %cst_23 = arith.constant dense<0xFF800000> : vector<128xf32>
    %41 = vector.multi_reduction <maximumf>, %40, %cst_23 [1] : vector<128x256xf32> to vector<128xf32>
    %42 = vector.shape_cast %41 : vector<128xf32> to vector<128x1xf32>
    %43 = vector.broadcast %42 : vector<128x1xf32> to vector<128x256xf32>
    %44 = arith.subf %40, %43 : vector<128x256xf32>
    %45 = math.exp %44 : vector<128x256xf32>
    %cst_24 = arith.constant dense<0.000000e+00> : vector<128xf32>
    %46 = vector.multi_reduction <add>, %45, %cst_24 [1] : vector<128x256xf32> to vector<128xf32>
    %47 = vector.shape_cast %46 : vector<128xf32> to vector<128x1xf32>
    %48 = tpu.reciprocal %47 {approx = true} : vector<128x1xf32> -> vector<128x1xf32>
    %49 = arith.mulf %47, %48 : vector<128x1xf32>
    %cst_25 = arith.constant 2.000000e+00 : f32
    %50 = vector.broadcast %cst_25 : f32 to vector<128x1xf32>
    %51 = arith.subf %50, %49 : vector<128x1xf32>
    %52 = arith.mulf %48, %51 : vector<128x1xf32>
    %53 = vector.broadcast %52 : vector<128x1xf32> to vector<128x256xf32>
    %54 = arith.mulf %45, %53 : vector<128x256xf32>
    %55 = arith.truncf %54 : vector<128x256xf32> to vector<128x256xbf16>
    %c0_26 = arith.constant 0 : index
    %c1 = arith.constant 1 : index
    %c0_27 = arith.constant 0 : index
    %c0_28 = arith.constant 0 : index
    %56 = vector.load %arg8[%c0_26, %c1, %c0_27, %c0_28] : memref<1x2x128x256xbf16, #tpu.memory_space<vmem>>, vector<1x1x128x256xbf16>
    %57 = vector.shape_cast %56 : vector<1x1x128x256xbf16> to vector<128x256xbf16>
    %58 = vector.shape_cast %55 : vector<128x256xbf16> to vector<1x1x128x256xbf16>
    tpu.vector_store %arg8[%c0_26, %c1, %c0_27, %c0_28], %58 {strides = array<i32>} : memref<1x2x128x256xbf16, #tpu.memory_space<vmem>>, vector<1x1x128x256xbf16>,
    %cst_29 = arith.constant dense<0.000000e+00> : vector<8x128xf32>
    %59 = tpu.matmul %39, %54, %cst_29 {dimension_numbers = #tpu.dot_dimension_numbers<[1], [1], [0], [0], [0, 0, 1, 0], [], []>} : vector<8x256xf32>, vector<128x256xf32>, vector<8x128xf32> -> vector<8x128xf32>
    %c0_30 = arith.constant 0 : index
    %c8_31 = arith.constant 8 : index
    %60 = vector.load %arg5[%c0_30, %c8_31] : memref<4x16xf32, #tpu.memory_space<vmem>>, vector<4x8xf32>
    %cst_32 = arith.constant dense<0.000000e+00> : vector<4x128xf32>
    %61 = tpu.matmul %60, %59, %cst_32 {dimension_numbers = #tpu.dot_dimension_numbers<[1], [0], [0], [1], [0, 0, 1, 1], [], []>} : vector<4x8xf32>, vector<8x128xf32>, vector<4x128xf32> -> vector<4x128xf32>
    %62 = arith.addf %36, %61 : vector<4x128xf32>
    %c0_33 = arith.constant 0 : index
    %c0_34 = arith.constant 0 : index
    %63 = vector.load %arg6[%c0_33, %c0_34] : memref<4x1xf32, #tpu.memory_space<vmem>>, vector<4x1xf32>
    %64 = vector.broadcast %63 : vector<4x1xf32> to vector<4x128xf32>
    %65 = arith.addf %62, %64 : vector<4x128xf32>
    %c0_35 = arith.constant 0 : index
    %c0_36 = arith.constant 0 : index
    %c0_37 = arith.constant 0 : index
    %66 = vector.load %arg7[%c0_35, %c0_36, %c0_37] : memref<1x4x128xf32, #tpu.memory_space<vmem>>, vector<1x4x128xf32>
    %67 = vector.shape_cast %66 : vector<1x4x128xf32> to vector<4x128xf32>
    %68 = vector.shape_cast %65 : vector<4x128xf32> to vector<1x4x128xf32>
    tpu.vector_store %arg7[%c0_35, %c0_36, %c0_37], %68 {strides = array<i32>} : memref<1x4x128xf32, #tpu.memory_space<vmem>>, vector<1x4x128xf32>,
    return
  }
  func.func @transform_0(%arg0: i32, %arg1: i32) -> (i32, i32, i32) {
    %c0_i32 = arith.constant 0 : i32
    %c0_i32_0 = arith.constant 0 : i32
    %c0_i32_1 = arith.constant 0 : i32
    return %arg0, %c0_i32, %c0_i32_0 : i32, i32, i32
  }
  func.func @transform_1(%arg0: i32, %arg1: i32) -> (i32, i32) {
    %c0_i32 = arith.constant 0 : i32
    %c0_i32_0 = arith.constant 0 : i32
    %c0_i32_1 = arith.constant 0 : i32
    return %c0_i32, %c0_i32_0 : i32, i32
  }
  func.func @transform_2(%arg0: i32, %arg1: i32) -> (i32, i32) {
    %c0_i32 = arith.constant 0 : i32
    %c0_i32_0 = arith.constant 0 : i32
    %c0_i32_1 = arith.constant 0 : i32
    return %c0_i32, %c0_i32_0 : i32, i32
  }
  func.func @transform_3(%arg0: i32, %arg1: i32) -> (i32, i32) {
    %c0_i32 = arith.constant 0 : i32
    %c0_i32_0 = arith.constant 0 : i32
    %c0_i32_1 = arith.constant 0 : i32
    return %c0_i32, %c0_i32_0 : i32, i32
  }
  func.func @transform_4(%arg0: i32, %arg1: i32) -> (i32, i32) {
    %c0_i32 = arith.constant 0 : i32
    %c0_i32_0 = arith.constant 0 : i32
    %c0_i32_1 = arith.constant 0 : i32
    return %c0_i32, %c0_i32_0 : i32, i32
  }
  func.func @transform_5(%arg0: i32, %arg1: i32) -> (i32, i32, i32) {
    %c0_i32 = arith.constant 0 : i32
    %c0_i32_0 = arith.constant 0 : i32
    return %arg0, %c0_i32, %arg1 : i32, i32, i32
  }
  func.func @transform_6(%arg0: i32, %arg1: i32) -> (i32, i32, i32, i32) {
    %c0_i32 = arith.constant 0 : i32
    %c0_i32_0 = arith.constant 0 : i32
    %c0_i32_1 = arith.constant 0 : i32
    return %arg0, %c0_i32, %arg1, %c0_i32_0 : i32, i32, i32, i32
  }
}

</mosaic_0001>

<llo_original>
// kernel: tpu_custom_call.1
$region0: #{tpu_custom_call.1}
  #allocation0 [shape = 'u32[]', space=smem, size = 0x4, offset = 0x4, fixed_abs, tag = 'smem constant byte address 0x4 - core index']
  #allocation1 [shape = 'u32[144,128]{1,0:T(1,128)}', space=vmem, size = 0x12000, scoped, tag = 'internal scratch']
  #allocation2 [shape = 'f32[32,256]{1,0:T(8,128)}', space=vmem, size = 0x8000, scoped, tag = 'scratch operand']
  #allocation7 [shape = 's32[]', space=sflag, size = 0x4, offset = 0, fixed_abs, tag = 'sflag constant byte address 0x0 - dummy sync flag']
  %s0 = inlined_call_operand.vmem [shape: f32[2,4,256], index: 0, kind: input, shape index: {}]
  %s1 = inlined_call_operand.vmem [shape: f32[16,4], index: 1, kind: input, shape index: {}]
  %s2 = inlined_call_operand.vmem [shape: f32[32,4], index: 2, kind: input, shape index: {}]
  %s3 = inlined_call_operand.vmem [shape: f32[4,16], index: 3, kind: input, shape index: {}]
  %s4 = inlined_call_operand.vmem [shape: f32[4,1], index: 4, kind: input, shape index: {}]
  %s5 = inlined_call_operand.hbm [shape: f32[2,4,256], index: 5, kind: output, shape index: {0}]
  %s6 = inlined_call_operand.hbm [shape: bf16[2,2,256,256], index: 6, kind: output, shape index: {1}]
  %7 = xla_tuple %s5, %s6
  %s8 = sld [smem:[#allocation0]]
  $region65: #{tpu_custom_call.1} parent=0
    _
  %s10 = ssub.s32 1, %s8
  %s11 = scalar_select 0, %s10, %s8
  $region1: #{tpu_custom_call.1} parent=0
    #allocation3 [shape = 'u8[4096]{0}', space=vmem, size = 0x1000, scoped, tag = 'output window, operand 0']
    #allocation4 [shape = 's32[2]{0}', space=sflag, size = 0x8, scoped, tag = 'scoped memory for tpu_custom_call.1']
    #allocation5 [shape = 'u8[262144]{0}', space=vmem, size = 0x40000, scoped, tag = 'output window, operand 1']
    #allocation6 [shape = 's32[2]{0}', space=sflag, size = 0x8, scoped, tag = 'scoped memory for tpu_custom_call.1']
    %12 = vsyncpa [#allocation4], 0
    %s13 = scalar_lea.sflag [#allocation4], 1
    %14 = vsyncpa %s13, 0
    %15 = vsyncpa [#allocation6], 0
    %s16 = scalar_lea.sflag [#allocation6], 1
    %17 = vsyncpa %s16, 0
    loop: start=0, step=1, limit=6
    $region2: #{tpu_custom_call.1} parent=1 // loop_pre_header
      _
    $region3: #{tpu_custom_call.1} parent=1 // loop_header
      %s19 = sphi 0, %s23
      %p20 = scmp.ge.s32.totalorder %s19, 6
      %s26 = sphi 0, %s38
      %s27 = sphi 0, %s34
      %s28 = sphi 0, %s26
      %s29 = sphi 0, %s27
      %s30 = sphi 0, %s28
      %s31 = sphi 0, %s29
      %s41 = sphi 0, %s43
      %s44 = sphi 0, %s41
      %s45 = sphi 0, %s44
      %s61 = sphi 0, %s45
      %s65 = sphi 0, %s65
      %s67 = sphi 0, %s65
      %s68 = sphi 0, %s67
      %s82 = sphi 0, %s68
      %s86 = sphi 0, %s86
      %s88 = sphi 0, %s86
      %s89 = sphi 0, %s88
      %s103 = sphi 0, %s89
      %s107 = sphi 0, %s107
      %s109 = sphi 0, %s107
      %s110 = sphi 0, %s109
      %s124 = sphi 0, %s110
      %s128 = sphi 0, %s128
      %s130 = sphi 0, %s128
      %s131 = sphi 0, %s130
      %s145 = sphi 0, %s131
      %s153 = sphi 0, %s155
      %s156 = sphi 0, %s153
      %s157 = sphi 0, %s156
      %s173 = sphi 0, %s157
      %s181 = sphi 0, %s183
      %s184 = sphi 0, %s181
      %s185 = sphi 0, %s184
      %s201 = sphi 0, %s185
    $region4: #{tpu_custom_call.1} parent=1 // loop_header_branch
      %22 = sbr.rel (%p20) target = $region8
    $region5: #{tpu_custom_call.1} parent=1 // loop_body
      %s24 = ssub.s32 %s19, 1
      %s25 = ssub.s32 %s19, 2
      %s32 = sadd.s32 1, %s27
      %p33 = scmp.ge.s32.totalorder %s32, 2
      %s34 = scalar_select %p33, 0, %s32
      %s35 = sadd.s32 1, %s26
      %s36 = scalar_select %p33, %s35, %s26
      %p37 = scmp.ge.s32.totalorder %s36, 2
      %s38 = scalar_select %p37, 0, %s36
      %s39 = ssub.s32 %s26, %s38
      %p40 = scmp.eq.s32.totalorder %s39, 0
      %s42 = sadd.s32 %s41, 1
      %s43 = scalar_select %p40, %s41, %s42
      %p46 = pneg %p40
      %p47 = scmp.eq.s32.totalorder %s19, 3
      %p48 = por %p46, %p47
      %p49 = scmp.ne.s32.totalorder %s41, %s44
      %p50 = scmp.eq.s32.totalorder %s19, 0
      %p51 = por %p49, %p50
      %p52 = scmp.ne.s32.totalorder %s41, %s44
      %p53 = scmp.eq.s32.totalorder %s24, 3
      %p54 = por %p52, %p53
      %p55 = scmp.ne.s32.totalorder %s44, %s45
      %p56 = scmp.eq.s32.totalorder %s24, 0
      %p57 = por %p55, %p56
      %p58 = scmp.ne.s32.totalorder %s44, %s45
      %p59 = scmp.eq.s32.totalorder %s25, 3
      %p60 = por %p58, %p59
      %p62 = scmp.ne.s32.totalorder %s45, %s61
      %p63 = scmp.eq.s32.totalorder %s25, 0
      %p64 = por %p62, %p63
      %s66 = sadd.s32 %s65, 1
      %p69 = scmp.eq.s32.totalorder %s19, 3
      %p70 = scmp.ne.s32.totalorder %s65, %s67
      %p71 = scmp.eq.s32.totalorder %s19, 0
      %p72 = por %p70, %p71
      %p73 = scmp.ne.s32.totalorder %s65, %s67
      %p74 = scmp.eq.s32.totalorder %s24, 3
      %p75 = por %p73, %p74
      %p76 = scmp.ne.s32.totalorder %s67, %s68
      %p77 = scmp.eq.s32.totalorder %s24, 0
      %p78 = por %p76, %p77
      %p79 = scmp.ne.s32.totalorder %s67, %s68
      %p80 = scmp.eq.s32.totalorder %s25, 3
      %p81 = por %p79, %p80
      %p83 = scmp.ne.s32.totalorder %s68, %s82
      %p84 = scmp.eq.s32.totalorder %s25, 0
      %p85 = por %p83, %p84
      %s87 = sadd.s32 %s86, 1
      %p90 = scmp.eq.s32.totalorder %s19, 3
      %p91 = scmp.ne.s32.totalorder %s86, %s88
      %p92 = scmp.eq.s32.totalorder %s19, 0
      %p93 = por %p91, %p92
      %p94 = scmp.ne.s32.totalorder %s86, %s88
      %p95 = scmp.eq.s32.totalorder %s24, 3
      %p96 = por %p94, %p95
      %p97 = scmp.ne.s32.totalorder %s88, %s89
      %p98 = scmp.eq.s32.totalorder %s24, 0
      %p99 = por %p97, %p98
      %p100 = scmp.ne.s32.totalorder %s88, %s89
      %p101 = scmp.eq.s32.totalorder %s25, 3
      %p102 = por %p100, %p101
      %p104 = scmp.ne.s32.totalorder %s89, %s103
      %p105 = scmp.eq.s32.totalorder %s25, 0
      %p106 = por %p104, %p105
      %s108 = sadd.s32 %s107, 1
      %p111 = scmp.eq.s32.totalorder %s19, 3
      %p112 = scmp.ne.s32.totalorder %s107, %s109
      %p113 = scmp.eq.s32.totalorder %s19, 0
      %p114 = por %p112, %p113
      %p115 = scmp.ne.s32.totalorder %s107, %s109
      %p116 = scmp.eq.s32.totalorder %s24, 3
      %p117 = por %p115, %p116
      %p118 = scmp.ne.s32.totalorder %s109, %s110
      %p119 = scmp.eq.s32.totalorder %s24, 0
      %p120 = por %p118, %p119
      %p121 = scmp.ne.s32.totalorder %s109, %s110
      %p122 = scmp.eq.s32.totalorder %s25, 3
      %p123 = por %p121, %p122
      %p125 = scmp.ne.s32.totalorder %s110, %s124
      %p126 = scmp.eq.s32.totalorder %s25, 0
      %p127 = por %p125, %p126
      %s129 = sadd.s32 %s128, 1
      %p132 = scmp.eq.s32.totalorder %s19, 3
      %p133 = scmp.ne.s32.totalorder %s128, %s130
      %p134 = scmp.eq.s32.totalorder %s19, 0
      %p135 = por %p133, %p134
      %p136 = scmp.ne.s32.totalorder %s128, %s130
      %p137 = scmp.eq.s32.totalorder %s24, 3
      %p138 = por %p136, %p137
      %p139 = scmp.ne.s32.totalorder %s130, %s131
      %p140 = scmp.eq.s32.totalorder %s24, 0
      %p141 = por %p139, %p140
      %p142 = scmp.ne.s32.totalorder %s130, %s131
      %p143 = scmp.eq.s32.totalorder %s25, 3
      %p144 = por %p142, %p143
      %p146 = scmp.ne.s32.totalorder %s131, %s145
      %p147 = scmp.eq.s32.totalorder %s25, 0
      %p148 = por %p146, %p147
      %s149 = ssub.s32 %s26, %s38
      %s150 = ssub.s32 %s27, %s34
      %s151 = sor.u32 %s149, %s150
      %p152 = scmp.eq.s32.totalorder %s151, 0
      %s154 = sadd.s32 %s153, 1
      %s155 = scalar_select %p152, %s153, %s154
      %p158 = pneg %p152
      %p159 = scmp.eq.s32.totalorder %s19, 3
      %p160 = por %p158, %p159
      %p161 = scmp.ne.s32.totalorder %s153, %s156
      %p162 = scmp.eq.s32.totalorder %s19, 0
      %p163 = por %p161, %p162
      %p164 = scmp.ne.s32.totalorder %s153, %s156
      %p165 = scmp.eq.s32.totalorder %s24, 3
      %p166 = por %p164, %p165
      %p167 = scmp.ne.s32.totalorder %s156, %s157
      %p168 = scmp.eq.s32.totalorder %s24, 0
      %p169 = por %p167, %p168
      %p170 = scmp.ne.s32.totalorder %s156, %s157
      %p171 = scmp.eq.s32.totalorder %s25, 3
      %p172 = por %p170, %p171
      %p174 = scmp.ne.s32.totalorder %s157, %s173
      %p175 = scmp.eq.s32.totalorder %s25, 0
      %p176 = por %p174, %p175
      %s177 = ssub.s32 %s26, %s38
      %s178 = ssub.s32 %s27, %s34
      %s179 = sor.u32 %s177, %s178
      %p180 = scmp.eq.s32.totalorder %s179, 0
      %s182 = sadd.s32 %s181, 1
      %s183 = scalar_select %p180, %s181, %s182
      %p186 = pneg %p180
      %p187 = scmp.eq.s32.totalorder %s19, 3
      %p188 = por %p186, %p187
      %p189 = scmp.ne.s32.totalorder %s181, %s184
      %p190 = scmp.eq.s32.totalorder %s19, 0
      %p191 = por %p189, %p190
      %p192 = scmp.ne.s32.totalorder %s181, %s184
      %p193 = scmp.eq.s32.totalorder %s24, 3
      %p194 = por %p192, %p193
      %p195 = scmp.ne.s32.totalorder %s184, %s185
      %p196 = scmp.eq.s32.totalorder %s24, 0
      %p197 = por %p195, %p196
      %p198 = scmp.ne.s32.totalorder %s184, %s185
      %p199 = scmp.eq.s32.totalorder %s25, 3
      %p200 = por %p198, %p199
      %p202 = scmp.ne.s32.totalorder %s185, %s201
      %p203 = scmp.eq.s32.totalorder %s25, 0
      %p204 = por %p202, %p203
      %p205 = scmp.le.s32.totalorder 1, %s19
      %p206 = scmp.lt.s32.totalorder %s19, 5
      %p207 = pnand %p205, %p206
      %p208 = pneg %p207
      // Predicated region
      $region9: #{tpu_custom_call.1} parent=5 // pred_check
        _
      $region10: #{tpu_custom_call.1} parent=5 // pred_check_branch
        %210 = sbr.rel (%p207) target = $region12
      $region11: #{tpu_custom_call.1} parent=5 // pred_region
        %s211 = ssub.s32 %s19, 1
        // Predicated region
        $region13: #{tpu_custom_call.1} parent=11 // pred_check
          %p212 = pneg %p78
        $region14: #{tpu_custom_call.1} parent=11 // pred_check_branch
          %214 = sbr.rel (%p212) target = $region16
        $region15: #{tpu_custom_call.1} parent=11 // pred_region
          _
        $region16: #{tpu_custom_call.1} parent=11 // pred_fallthru
          _
        // Predicated region
        $region17: #{tpu_custom_call.1} parent=11 // pred_check
          %p215 = pneg %p99
        $region18: #{tpu_custom_call.1} parent=11 // pred_check_branch
          %217 = sbr.rel (%p215) target = $region20
        $region19: #{tpu_custom_call.1} parent=11 // pred_region
          _
        $region20: #{tpu_custom_call.1} parent=11 // pred_fallthru
          _
        // Predicated region
        $region21: #{tpu_custom_call.1} parent=11 // pred_check
          %p218 = pneg %p120
        $region22: #{tpu_custom_call.1} parent=11 // pred_check_branch
          %220 = sbr.rel (%p218) target = $region24
        $region23: #{tpu_custom_call.1} parent=11 // pred_region
          _
        $region24: #{tpu_custom_call.1} parent=11 // pred_fallthru
          _
        // Predicated region
        $region25: #{tpu_custom_call.1} parent=11 // pred_check
          %p221 = pneg %p141
        $region26: #{tpu_custom_call.1} parent=11 // pred_check_branch
          %223 = sbr.rel (%p221) target = $region28
        $region27: #{tpu_custom_call.1} parent=11 // pred_region
          _
        $region28: #{tpu_custom_call.1} parent=11 // pred_fallthru
          _
      $region12: #{tpu_custom_call.1} parent=5 // pred_fallthru
        _
      %p224 = scmp.lt.s32.totalorder %s19, 4
      // Predicated region
      $region29: #{tpu_custom_call.1} parent=5 // pred_check
        %p225 = pneg %p224
      $region30: #{tpu_custom_call.1} parent=5 // pred_check_branch
        %227 = sbr.rel (%p225) target = $region32
      $region31: #{tpu_custom_call.1} parent=5 // pred_region
        // Predicated region
        $region33: #{tpu_custom_call.1} parent=31 // pred_check
          %p228 = pneg %p51
        $region34: #{tpu_custom_call.1} parent=31 // pred_check_branch
          %230 = sbr.rel (%p228) target = $region36
        $region35: #{tpu_custom_call.1} parent=31 // pred_region
          %p231 = scmp.lt.s32.totalorder %s26, 1
          %s232 = scalar_select %p231, %s26, 1
          %s233 = smul.addr %s232, 2
          %s234 = smul.addr %s233, 4
          %s235 = scalar_lea.vmem %s0, %s234
        $region36: #{tpu_custom_call.1} parent=31 // pred_fallthru
          _
      $region32: #{tpu_custom_call.1} parent=5 // pred_fallthru
        _
      %p236 = scmp.le.s32.totalorder 1, %s19
      %p237 = scmp.lt.s32.totalorder %s19, 5
      %p238 = pnand %p236, %p237
      %p239 = pneg %p238
      // Predicated region
      $region37: #{tpu_custom_call.1} parent=5 // pred_check
        _
      $region38: #{tpu_custom_call.1} parent=5 // pred_check_branch
        %241 = sbr.rel (%p238) target = $region40
      $region39: #{tpu_custom_call.1} parent=5 // pred_region
        %s242 = ssub.s32 %s19, 1
        %p243 = scmp.lt.s32.totalorder %s28, 1
        %s244 = scalar_select %p243, %s28, 1
        %s245 = smul.addr %s244, 2
        %s246 = smul.addr %s245, 4
        %s247 = scalar_lea.vmem %s0, %s246
        %p248 = pneg %p57
        %p249 = pneg %p54
        %p250 = pneg %p78
        %p251 = pneg %p75
        %p252 = pneg %p99
        %p253 = pneg %p96
        %p254 = pneg %p120
        %p255 = pneg %p117
        %p256 = pneg %p141
        %p257 = pneg %p138
        %p258 = pneg %p169
        %p259 = pneg %p166
        %s260 = sand.u32 %s156, 1
        %s261 = scalar_lea.sflag [#allocation4], %s260
        %s262 = sand.u32 %s156, 1
        %s263 = smul.addr %s262, 4
        %s264 = scalar_lea.vmem [#allocation3], %s263
        %p265 = pneg %p197
        %p266 = pneg %p194
        %s267 = sand.u32 %s184, 1
        %s268 = scalar_lea.sflag [#allocation6], %s267
        %s269 = sand.u32 %s184, 1
        %s270 = smul.addr %s269, 256
        %s271 = scalar_lea.vmem [#allocation5], %s270
        %p272 = scmp.lt.s32.totalorder %s28, 1
        %s273 = scalar_select %p272, %s28, 1
        %s274 = smul.addr %s273, 2
        %s275 = smul.addr %s274, 4
        %s276 = scalar_lea.vmem %s0, %s275
        %s277 = smul.u32 16, %s29
        %p278 = scmp.eq.s32.totalorder %s29, 0
        // Predicated region
        $region41: #{tpu_custom_call.1} parent=39 // pred_check
          %p279 = pneg %p278
        $region42: #{tpu_custom_call.1} parent=39 // pred_check_branch
          %281 = sbr.rel (%p279) target = $region44
        $region43: #{tpu_custom_call.1} parent=39 // pred_region
          %v282 = vld [vmem:[%s2] sm:$0xff]
          %v283 = vld [vmem:[%s2 + $0x8] sm:$0xff]
          %v284 = vld [vmem:[%s2 + $0x10] sm:$0xff]
          %v285 = vld [vmem:[%s2 + $0x18] sm:$0xff]
          %v286 = vld [vmem:[%s276] sm:$0xff]
          %v288 = vcombine.high %v286, %v286
          %vm289 = vcmask 31744
          %v291 = vsel %vm289, %v282, 0
          %v294 = vsel %vm289, %v283, 0
          %v297 = vsel %vm289, %v284, 0
          %v300 = vsel %vm289, %v285, 0
          %vm302 = vcmask 1043456
          %v303 = vsel %vm302, %v286, 0
          %v305 = vsel %vm302, %v288, 0
          %307 = vmatprep.subr.mxu0 %v305
          %308 = vmatpush1.msra.mxu0 %v303
          %309 = vmatprep.subr.mxu0 0.0
          %310 = vmatpush1.msra.mxu0 0.0
          %311 = vmatprep.subr.mxu0 0.0
          %312 = vmatpush1.msra.mxu0 0.0
          %313 = vmatprep.subr.mxu0 0.0
          %314 = vmatpush1.msra.mxu0 0.0
          %315 = vmatprep.subr.mxu0 0.0
          %316 = vmatpush1.msra.mxu0 0.0
          %317 = vmatprep.subr.mxu0 0.0
          %318 = vmatpush1.msra.mxu0 0.0
          %319 = vmatprep.subr.mxu0 0.0
          %320 = vmatpush1.msra.mxu0 0.0
          %321 = vmatprep.subr.mxu0 0.0
          %322 = vmatpush1.msra.mxu0 0.0
          %323 = vmatprep.subr.mxu0 0.0
          %324 = vmatpush1.msra.mxu0 0.0
          %325 = vmatprep.subr.mxu0 0.0
          %326 = vmatpush1.msra.mxu0 0.0
          %327 = vmatprep.subr.mxu0 0.0
          %328 = vmatpush1.msra.mxu0 0.0
          %329 = vmatprep.subr.mxu0 0.0
          %330 = vmatpush1.msra.mxu0 0.0
          %331 = vmatprep.subr.mxu0 0.0
          %332 = vmatpush1.msra.mxu0 0.0
          %333 = vmatprep.subr.mxu0 0.0
          %334 = vmatpush1.msra.mxu0 0.0
          %335 = vmatprep.subr.mxu0 0.0
          %336 = vmatpush1.msra.mxu0 0.0
          %337 = vmatprep.subr.mxu0 0.0
          %338 = vmatpush1.msra.mxu0 0.0
          %339 = vmatprep.subr.mxu0 0.0
          %340 = vmatpush1.msra.mxu0 0.0
          %341 = vmatprep.subr.mxu0 0.0
          %342 = vmatpush1.msra.mxu0 0.0
          %343 = vmatprep.subr.mxu0 0.0
          %344 = vmatpush1.msra.mxu0 0.0
          %345 = vmatprep.subr.mxu0 0.0
          %346 = vmatpush1.msra.mxu0 0.0
          %347 = vmatprep.subr.mxu0 0.0
          %348 = vmatpush1.msra.mxu0 0.0
          %349 = vmatprep.subr.mxu0 0.0
          %350 = vmatpush1.msra.mxu0 0.0
          %351 = vmatprep.subr.mxu0 0.0
          %352 = vmatpush1.msra.mxu0 0.0
          %353 = vmatprep.subr.mxu0 0.0
          %354 = vmatpush1.msra.mxu0 0.0
          %355 = vmatprep.subr.mxu0 0.0
          %356 = vmatpush1.msra.mxu0 0.0
          %357 = vmatprep.subr.mxu0 0.0
          %358 = vmatpush1.msra.mxu0 0.0
          %359 = vmatprep.subr.mxu0 0.0
          %360 = vmatpush1.msra.mxu0 0.0
          %361 = vmatprep.subr.mxu0 0.0
          %362 = vmatpush1.msra.mxu0 0.0
          %363 = vmatprep.subr.mxu0 0.0
          %364 = vmatpush1.msra.mxu0 0.0
          %365 = vmatprep.subr.mxu0 0.0
          %366 = vmatpush1.msra.mxu0 0.0
          %367 = vmatprep.subr.mxu0 0.0
          %368 = vmatpush1.msra.mxu0 0.0
          %369 = vmatprep.subr.mxu0 0.0
          %370 = vmatpush1.msra.mxu0 0.0
          %371 = vmatprep.mubr.f32.mxu0 0.0
          %372 = vmatmul.mubr.f32.gmra.mrb[0].mxu0 %v291
          %v373 = vpop.f32.mrb[0].mxu0
          %v374 = vadd.f32 0.0, %v373
          %v375 = vpop.f32.mrb[0].mxu0
          %v376 = vadd.f32 0.0, %v375
          %377 = vmatprep.mubr.f32.mxu0 0.0
          %378 = vmatmul.mubr.f32.gmra.mrb[0].mxu0 %v294
          %v379 = vpop.f32.mrb[0].mxu0
          %v380 = vadd.f32 0.0, %v379
          %v381 = vpop.f32.mrb[0].mxu0
          %v382 = vadd.f32 0.0, %v381
          %383 = vmatprep.mubr.f32.mxu0 0.0
          %384 = vmatmul.mubr.f32.gmra.mrb[0].mxu0 %v297
          %v385 = vpop.f32.mrb[0].mxu0
          %v386 = vadd.f32 0.0, %v385
          %v387 = vpop.f32.mrb[0].mxu0
          %v388 = vadd.f32 0.0, %v387
          %389 = vmatprep.mubr.f32.mxu0 0.0
          %390 = vmatmul.mubr.f32.gmra.mrb[0].mxu0 %v300
          %v391 = vpop.f32.mrb[0].mxu0
          %v392 = vadd.f32 0.0, %v391
          %v393 = vpop.f32.mrb[0].mxu0
          %v394 = vadd.f32 0.0, %v393
          %395 = vdwg.mxu0
          %396 = vst [vmem:[#allocation2] sm:$0xff] %v374
          %397 = vst [vmem:[#allocation2 + $0x8] sm:$0xff] %v376
          %398 = vst [vmem:[#allocation2 + $0x10] sm:$0xff] %v380
          %399 = vst [vmem:[#allocation2 + $0x18] sm:$0xff] %v382
          %400 = vst [vmem:[#allocation2 + $0x20] sm:$0xff] %v386
          %401 = vst [vmem:[#allocation2 + $0x28] sm:$0xff] %v388
          %402 = vst [vmem:[#allocation2 + $0x30] sm:$0xff] %v392
          %403 = vst [vmem:[#allocation2 + $0x38] sm:$0xff] %v394
        $region44: #{tpu_custom_call.1} parent=39 // pred_fallthru
          _
        %s404 = smul.u32 %s29, 128
        %s405 = sshra.s32 %s404, 7
        %s406 = sand.u32 %s404, 127
        %s407 = smul.addr %s405, 4
        %s408 = scalar_lea.vmem %s276, %s407
        %v409 = vld [vmem:[%s408] sm:$0xf]
        %v410 = vld [vmem:[%s1] sm:$0xff]
        %v411 = vld [vmem:[%s1 + $0x8] sm:$0xff]
        %vm412 = vcmask 31744
        %v414 = vsel %vm412, %v410, 0
        %v417 = vsel %vm412, %v411, 0
        %vm419 = vcmask 1043456
        %v421 = vsel %vm419, %v409, 0
        %423 = vmatprep.subr.mxu0 0.0
        %424 = vmatpush1.msra.mxu0 %v421
        %425 = vmatprep.subr.mxu0 0.0
        %426 = vmatpush1.msra.mxu0 0.0
        %427 = vmatprep.subr.mxu0 0.0
        %428 = vmatpush1.msra.mxu0 0.0
        %429 = vmatprep.subr.mxu0 0.0
        %430 = vmatpush1.msra.mxu0 0.0
        %431 = vmatprep.subr.mxu0 0.0
        %432 = vmatpush1.msra.mxu0 0.0
        %433 = vmatprep.subr.mxu0 0.0
        %434 = vmatpush1.msra.mxu0 0.0
        %435 = vmatprep.subr.mxu0 0.0
        %436 = vmatpush1.msra.mxu0 0.0
        %437 = vmatprep.subr.mxu0 0.0
        %438 = vmatpush1.msra.mxu0 0.0
        %439 = vmatprep.subr.mxu0 0.0
        %440 = vmatpush1.msra.mxu0 0.0
        %441 = vmatprep.subr.mxu0 0.0
        %442 = vmatpush1.msra.mxu0 0.0
        %443 = vmatprep.subr.mxu0 0.0
        %444 = vmatpush1.msra.mxu0 0.0
        %445 = vmatprep.subr.mxu0 0.0
        %446 = vmatpush1.msra.mxu0 0.0
        %447 = vmatprep.subr.mxu0 0.0
        %448 = vmatpush1.msra.mxu0 0.0
        %449 = vmatprep.subr.mxu0 0.0
        %450 = vmatpush1.msra.mxu0 0.0
        %451 = vmatprep.subr.mxu0 0.0
        %452 = vmatpush1.msra.mxu0 0.0
        %453 = vmatprep.subr.mxu0 0.0
        %454 = vmatpush1.msra.mxu0 0.0
        %455 = vmatprep.subr.mxu0 0.0
        %456 = vmatpush1.msra.mxu0 0.0
        %457 = vmatprep.subr.mxu0 0.0
        %458 = vmatpush1.msra.mxu0 0.0
        %459 = vmatprep.subr.mxu0 0.0
        %460 = vmatpush1.msra.mxu0 0.0
        %461 = vmatprep.subr.mxu0 0.0
        %462 = vmatpush1.msra.mxu0 0.0
        %463 = vmatprep.subr.mxu0 0.0
        %464 = vmatpush1.msra.mxu0 0.0
        %465 = vmatprep.subr.mxu0 0.0
        %466 = vmatpush1.msra.mxu0 0.0
        %467 = vmatprep.subr.mxu0 0.0
        %468 = vmatpush1.msra.mxu0 0.0
        %469 = vmatprep.subr.mxu0 0.0
        %470 = vmatpush1.msra.mxu0 0.0
        %471 = vmatprep.subr.mxu0 0.0
        %472 = vmatpush1.msra.mxu0 0.0
        %473 = vmatprep.subr.mxu0 0.0
        %474 = vmatpush1.msra.mxu0 0.0
        %475 = vmatprep.subr.mxu0 0.0
        %476 = vmatpush1.msra.mxu0 0.0
        %477 = vmatprep.subr.mxu0 0.0
        %478 = vmatpush1.msra.mxu0 0.0
        %479 = vmatprep.subr.mxu0 0.0
        %480 = vmatpush1.msra.mxu0 0.0
        %481 = vmatprep.subr.mxu0 0.0
        %482 = vmatpush1.msra.mxu0 0.0
        %483 = vmatprep.subr.mxu0 0.0
        %484 = vmatpush1.msra.mxu0 0.0
        %485 = vmatprep.subr.mxu0 0.0
        %486 = vmatpush1.msra.mxu0 0.0
        %487 = vmatprep.mubr.f32.mxu0 0.0
        %488 = vmatmul.mubr.f32.gmra.mrb[0].mxu0 %v414
        %v489 = vpop.f32.mrb[0].mxu0
        %v490 = vadd.f32 0.0, %v489
        %v491 = vpop.f32.mrb[0].mxu0
        %492 = vmatprep.mubr.f32.mxu0 0.0
        %493 = vmatmul.mubr.f32.gmra.mrb[0].mxu0 %v417
        %v494 = vpop.f32.mrb[0].mxu0
        %v495 = vadd.f32 0.0, %v494
        %v496 = vpop.f32.mrb[0].mxu0
        %497 = vdwg.mxu0
        %v498 = vld [vmem:[#allocation2] sm:$0xff]
        %v499 = vld [vmem:[#allocation2 + $0x8] sm:$0xff]
        %v500 = vld [vmem:[#allocation2 + $0x20] sm:$0xff]
        %v501 = vld [vmem:[#allocation2 + $0x28] sm:$0xff]
        %502 = vxpose.xlu0.b32.start [1/16] %v490, 128
        %503 = vxpose.xlu0.b32.cont [2/16] 0.0, 128
        %504 = vxpose.xlu0.b32.cont [3/16] 0.0, 128
        %505 = vxpose.xlu0.b32.cont [4/16] 0.0, 128
        %506 = vxpose.xlu0.b32.cont [5/16] 0.0, 128
        %507 = vxpose.xlu0.b32.cont [6/16] 0.0, 128
        %508 = vxpose.xlu0.b32.cont [7/16] 0.0, 128
        %509 = vxpose.xlu0.b32.cont [8/16] 0.0, 128
        %510 = vxpose.xlu0.b32.cont [9/16] 0.0, 128
        %511 = vxpose.xlu0.b32.cont [10/16] 0.0, 128
        %512 = vxpose.xlu0.b32.cont [11/16] 0.0, 128
        %513 = vxpose.xlu0.b32.cont [12/16] 0.0, 128
        %514 = vxpose.xlu0.b32.cont [13/16] 0.0, 128
        %515 = vxpose.xlu0.b32.cont [14/16] 0.0, 128
        %516 = vxpose.xlu0.b32.cont [15/16] 0.0, 128
        %517 = vxpose.xlu0.b32.end [16/16] 0.0, 128
        %v518 = vpop.trf.xlu0
        %v519 = vpop.trf.xlu0
        %v520 = vpop.trf.xlu0
        %v521 = vpop.trf.xlu0
        %v522 = vpop.trf.xlu0
        %v523 = vpop.trf.xlu0
        %v524 = vpop.trf.xlu0
        %v525 = vpop.trf.xlu0
        %v526 = vpop.trf.xlu0
        %v527 = vpop.trf.xlu0
        %v528 = vpop.trf.xlu0
        %v529 = vpop.trf.xlu0
        %v530 = vpop.trf.xlu0
        %v531 = vpop.trf.xlu0
        %v532 = vpop.trf.xlu0
        %v533 = vpop.trf.xlu0
        %vm534 = vcmask 64512
        %v536 = vsel %vm534, %v518, 0
        %v539 = vsel %vm534, %v519, 0
        %v542 = vsel %vm534, %v520, 0
        %v545 = vsel %vm534, %v521, 0
        %v548 = vsel %vm534, %v522, 0
        %v551 = vsel %vm534, %v523, 0
        %v554 = vsel %vm534, %v524, 0
        %v557 = vsel %vm534, %v525, 0
        %v560 = vsel %vm534, %v526, 0
        %v563 = vsel %vm534, %v527, 0
        %v566 = vsel %vm534, %v528, 0
        %v569 = vsel %vm534, %v529, 0
        %v572 = vsel %vm534, %v530, 0
        %v575 = vsel %vm534, %v531, 0
        %v578 = vsel %vm534, %v532, 0
        %v581 = vsel %vm534, %v533, 0
        %583 = vmatprep.subr.mxu0 %v499
        %584 = vmatpush1.msra.mxu0 %v498
        %585 = vmatprep.subr.mxu0 0.0
        %586 = vmatpush1.msra.mxu0 0.0
        %587 = vmatprep.subr.mxu0 0.0
        %588 = vmatpush1.msra.mxu0 0.0
        %589 = vmatprep.subr.mxu0 0.0
        %590 = vmatpush1.msra.mxu0 0.0
        %591 = vmatprep.subr.mxu0 0.0
        %592 = vmatpush1.msra.mxu0 0.0
        %593 = vmatprep.subr.mxu0 0.0
        %594 = vmatpush1.msra.mxu0 0.0
        %595 = vmatprep.subr.mxu0 0.0
        %596 = vmatpush1.msra.mxu0 0.0
        %597 = vmatprep.subr.mxu0 0.0
        %598 = vmatpush1.msra.mxu0 0.0
        %599 = vmatprep.subr.mxu0 0.0
        %600 = vmatpush1.msra.mxu0 0.0
        %601 = vmatprep.subr.mxu0 0.0
        %602 = vmatpush1.msra.mxu0 0.0
        %603 = vmatprep.subr.mxu0 0.0
        %604 = vmatpush1.msra.mxu0 0.0
        %605 = vmatprep.subr.mxu0 0.0
        %606 = vmatpush1.msra.mxu0 0.0
        %607 = vmatprep.subr.mxu0 0.0
        %608 = vmatpush1.msra.mxu0 0.0
        %609 = vmatprep.subr.mxu0 0.0
        %610 = vmatpush1.msra.mxu0 0.0
        %611 = vmatprep.subr.mxu0 0.0
        %612 = vmatpush1.msra.mxu0 0.0
        %613 = vmatprep.subr.mxu0 0.0
        %614 = vmatpush1.msra.mxu0 0.0
        %615 = vmatprep.subr.mxu0 0.0
        %616 = vmatpush1.msra.mxu0 0.0
        %617 = vmatprep.subr.mxu0 0.0
        %618 = vmatpush1.msra.mxu0 0.0
        %619 = vmatprep.subr.mxu0 0.0
        %620 = vmatpush1.msra.mxu0 0.0
        %621 = vmatprep.subr.mxu0 0.0
        %622 = vmatpush1.msra.mxu0 0.0
        %623 = vmatprep.subr.mxu0 0.0
        %624 = vmatpush1.msra.mxu0 0.0
        %625 = vmatprep.subr.mxu0 0.0
        %626 = vmatpush1.msra.mxu0 0.0
        %627 = vmatprep.subr.mxu0 0.0
        %628 = vmatpush1.msra.mxu0 0.0
        %629 = vmatprep.subr.mxu0 0.0
        %630 = vmatpush1.msra.mxu0 0.0
        %631 = vmatprep.subr.mxu0 0.0
        %632 = vmatpush1.msra.mxu0 0.0
        %633 = vmatprep.subr.mxu0 0.0
        %634 = vmatpush1.msra.mxu0 0.0
        %635 = vmatprep.subr.mxu0 0.0
        %636 = vmatpush1.msra.mxu0 0.0
        %637 = vmatprep.subr.mxu0 0.0
        %638 = vmatpush1.msra.mxu0 0.0
        %639 = vmatprep.subr.mxu0 0.0
        %640 = vmatpush1.msra.mxu0 0.0
        %641 = vmatprep.subr.mxu0 0.0
        %642 = vmatpush1.msra.mxu0 0.0
        %643 = vmatprep.subr.mxu0 0.0
        %644 = vmatpush1.msra.mxu0 0.0
        %645 = vmatprep.subr.mxu0 0.0
        %646 = vmatpush1.msra.mxu0 0.0
        %647 = vmatprep.mubr.f32.mxu0 0.0
        %648 = vmatmul.mubr.f32.gmra.mrb[0].mxu0 %v536
        %v649 = vpop.f32.mrb[0].mxu0
        %v650 = vadd.f32 0.0, %v649
        %v651 = vpop.f32.mrb[0].mxu0
        %v652 = vadd.f32 0.0, %v651
        %653 = vmatprep.mubr.f32.mxu0 0.0
        %654 = vmatmul.mubr.f32.gmra.mrb[0].mxu0 %v539
        %v655 = vpop.f32.mrb[0].mxu0
        %v656 = vadd.f32 0.0, %v655
        %v657 = vpop.f32.mrb[0].mxu0
        %v658 = vadd.f32 0.0, %v657
        %659 = vmatprep.mubr.f32.mxu0 0.0
        %660 = vmatmul.mubr.f32.gmra.mrb[0].mxu0 %v542
        %v661 = vpop.f32.mrb[0].mxu0
        %v662 = vadd.f32 0.0, %v661
        %v663 = vpop.f32.mrb[0].mxu0
        %v664 = vadd.f32 0.0, %v663
        %665 = vmatprep.mubr.f32.mxu0 0.0
        %666 = vmatmul.mubr.f32.gmra.mrb[0].mxu0 %v545
        %v667 = vpop.f32.mrb[0].mxu0
        %v668 = vadd.f32 0.0, %v667
        %v669 = vpop.f32.mrb[0].mxu0
        %v670 = vadd.f32 0.0, %v669
        %671 = vmatprep.mubr.f32.mxu0 0.0
        %672 = vmatmul.mubr.f32.gmra.mrb[0].mxu0 %v548
        %v673 = vpop.f32.mrb[0].mxu0
        %v674 = vadd.f32 0.0, %v673
        %v675 = vpop.f32.mrb[0].mxu0
        %v676 = vadd.f32 0.0, %v675
        %677 = vmatprep.mubr.f32.mxu0 0.0
        %678 = vmatmul.mubr.f32.gmra.mrb[0].mxu0 %v551
        %v679 = vpop.f32.mrb[0].mxu0
        %v680 = vadd.f32 0.0, %v679
        %v681 = vpop.f32.mrb[0].mxu0
        %v682 = vadd.f32 0.0, %v681
        %683 = vmatprep.mubr.f32.mxu0 0.0
        %684 = vmatmul.mubr.f32.gmra.mrb[0].mxu0 %v554
        %v685 = vpop.f32.mrb[0].mxu0
        %v686 = vadd.f32 0.0, %v685
        %v687 = vpop.f32.mrb[0].mxu0
        %v688 = vadd.f32 0.0, %v687
        %689 = vmatprep.mubr.f32.mxu0 0.0
        %690 = vmatmul.mubr.f32.gmra.mrb[0].mxu0 %v557
        %v691 = vpop.f32.mrb[0].mxu0
        %v692 = vadd.f32 0.0, %v691
        %v693 = vpop.f32.mrb[0].mxu0
        %v694 = vadd.f32 0.0, %v693
        %695 = vmatprep.mubr.f32.mxu0 0.0
        %696 = vmatmul.mubr.f32.gmra.mrb[0].mxu0 %v560
        %v697 = vpop.f32.mrb[0].mxu0
        %v698 = vadd.f32 0.0, %v697
        %v699 = vpop.f32.mrb[0].mxu0
        %v700 = vadd.f32 0.0, %v699
        %701 = vmatprep.mubr.f32.mxu0 0.0
        %702 = vmatmul.mubr.f32.gmra.mrb[0].mxu0 %v563
        %v703 = vpop.f32.mrb[0].mxu0
        %v704 = vadd.f32 0.0, %v703
        %v705 = vpop.f32.mrb[0].mxu0
        %v706 = vadd.f32 0.0, %v705
        %707 = vmatprep.mubr.f32.mxu0 0.0
        %708 = vmatmul.mubr.f32.gmra.mrb[0].mxu0 %v566
        %v709 = vpop.f32.mrb[0].mxu0
        %v710 = vadd.f32 0.0, %v709
        %v711 = vpop.f32.mrb[0].mxu0
        %v712 = vadd.f32 0.0, %v711
        %713 = vmatprep.mubr.f32.mxu0 0.0
        %714 = vmatmul.mubr.f32.gmra.mrb[0].mxu0 %v569
        %v715 = vpop.f32.mrb[0].mxu0
        %v716 = vadd.f32 0.0, %v715
        %v717 = vpop.f32.mrb[0].mxu0
        %v718 = vadd.f32 0.0, %v717
        %719 = vmatprep.mubr.f32.mxu0 0.0
        %720 = vmatmul.mubr.f32.gmra.mrb[0].mxu0 %v572
        %v721 = vpop.f32.mrb[0].mxu0
        %v722 = vadd.f32 0.0, %v721
        %v723 = vpop.f32.mrb[0].mxu0
        %v724 = vadd.f32 0.0, %v723
        %725 = vmatprep.mubr.f32.mxu0 0.0
        %726 = vmatmul.mubr.f32.gmra.mrb[0].mxu0 %v575
        %v727 = vpop.f32.mrb[0].mxu0
        %v728 = vadd.f32 0.0, %v727
        %v729 = vpop.f32.mrb[0].mxu0
        %v730 = vadd.f32 0.0, %v729
        %731 = vmatprep.mubr.f32.mxu0 0.0
        %732 = vmatmul.mubr.f32.gmra.mrb[0].mxu0 %v578
        %v733 = vpop.f32.mrb[0].mxu0
        %v734 = vadd.f32 0.0, %v733
        %v735 = vpop.f32.mrb[0].mxu0
        %v736 = vadd.f32 0.0, %v735
        %737 = vmatprep.mubr.f32.mxu0 0.0
        %738 = vmatmul.mubr.f32.gmra.mrb[0].mxu0 %v581
        %v739 = vpop.f32.mrb[0].mxu0
        %v740 = vadd.f32 0.0, %v739
        %v741 = vpop.f32.mrb[0].mxu0
        %v742 = vadd.f32 0.0, %v741
        %743 = vdwg.mxu0
        %v744 = vmax.f32 %v650, %v652
        %745 = vmax.xlane.f32.xlu0 %v744
        %v746 = vpop.xlane.xlu0 %745
        %v747 = vmax.f32 %v656, %v658
        %748 = vmax.xlane.f32.xlu0 %v747
        %v749 = vpop.xlane.xlu0 %748
        %v750 = vmax.f32 %v662, %v664
        %751 = vmax.xlane.f32.xlu0 %v750
        %v752 = vpop.xlane.xlu0 %751
        %v753 = vmax.f32 %v668, %v670
        %754 = vmax.xlane.f32.xlu0 %v753
        %v755 = vpop.xlane.xlu0 %754
        %v756 = vmax.f32 %v674, %v676
        %757 = vmax.xlane.f32.xlu0 %v756
        %v758 = vpop.xlane.xlu0 %757
        %v759 = vmax.f32 %v680, %v682
        %760 = vmax.xlane.f32.xlu0 %v759
        %v761 = vpop.xlane.xlu0 %760
        %v762 = vmax.f32 %v686, %v688
        %763 = vmax.xlane.f32.xlu0 %v762
        %v764 = vpop.xlane.xlu0 %763
        %v765 = vmax.f32 %v692, %v694
        %766 = vmax.xlane.f32.xlu0 %v765
        %v767 = vpop.xlane.xlu0 %766
        %v768 = vmax.f32 %v698, %v700
        %769 = vmax.xlane.f32.xlu0 %v768
        %v770 = vpop.xlane.xlu0 %769
        %v771 = vmax.f32 %v704, %v706
        %772 = vmax.xlane.f32.xlu0 %v771
        %v773 = vpop.xlane.xlu0 %772
        %v774 = vmax.f32 %v710, %v712
        %775 = vmax.xlane.f32.xlu0 %v774
        %v776 = vpop.xlane.xlu0 %775
        %v777 = vmax.f32 %v716, %v718
        %778 = vmax.xlane.f32.xlu0 %v777
        %v779 = vpop.xlane.xlu0 %778
        %v780 = vmax.f32 %v722, %v724
        %781 = vmax.xlane.f32.xlu0 %v780
        %v782 = vpop.xlane.xlu0 %781
        %v783 = vmax.f32 %v728, %v730
        %784 = vmax.xlane.f32.xlu0 %v783
        %v785 = vpop.xlane.xlu0 %784
        %v786 = vmax.f32 %v734, %v736
        %787 = vmax.xlane.f32.xlu0 %v786
        %v788 = vpop.xlane.xlu0 %787
        %v789 = vmax.f32 %v740, %v742
        %790 = vmax.xlane.f32.xlu0 %v789
        %v791 = vpop.xlane.xlu0 %790
        %v792 = vsub.f32 %v650, %v746
        %v793 = vsub.f32 %v652, %v746
        %v794 = vsub.f32 %v656, %v749
        %v795 = vsub.f32 %v658, %v749
        %v796 = vsub.f32 %v662, %v752
        %v797 = vsub.f32 %v664, %v752
        %v798 = vsub.f32 %v668, %v755
        %v799 = vsub.f32 %v670, %v755
        %v800 = vsub.f32 %v674, %v758
        %v801 = vsub.f32 %v676, %v758
        %v802 = vsub.f32 %v680, %v761
        %v803 = vsub.f32 %v682, %v761
        %v804 = vsub.f32 %v686, %v764
        %v805 = vsub.f32 %v688, %v764
        %v806 = vsub.f32 %v692, %v767
        %v807 = vsub.f32 %v694, %v767
        %v808 = vsub.f32 %v698, %v770
        %v809 = vsub.f32 %v700, %v770
        %v810 = vsub.f32 %v704, %v773
        %v811 = vsub.f32 %v706, %v773
        %v812 = vsub.f32 %v710, %v776
        %v813 = vsub.f32 %v712, %v776
        %v814 = vsub.f32 %v716, %v779
        %v815 = vsub.f32 %v718, %v779
        %v816 = vsub.f32 %v722, %v782
        %v817 = vsub.f32 %v724, %v782
        %v818 = vsub.f32 %v728, %v785
        %v819 = vsub.f32 %v730, %v785
        %v820 = vsub.f32 %v734, %v788
        %v821 = vsub.f32 %v736, %v788
        %v822 = vsub.f32 %v740, %v791
        %v823 = vsub.f32 %v742, %v791
        %v824 = vmul.f32 %v792, 1.442695
        %v825 = vpow.pop %v824
        %v826 = vmul.f32 %v793, 1.442695
        %v827 = vpow.pop %v826
        %v828 = vmul.f32 %v794, 1.442695
        %v829 = vpow.pop %v828
        %v830 = vmul.f32 %v795, 1.442695
        %v831 = vpow.pop %v830
        %v832 = vmul.f32 %v796, 1.442695
        %v833 = vpow.pop %v832
        %v834 = vmul.f32 %v797, 1.442695
        %v835 = vpow.pop %v834
        %v836 = vmul.f32 %v798, 1.442695
        %v837 = vpow.pop %v836
        %v838 = vmul.f32 %v799, 1.442695
        %v839 = vpow.pop %v838
        %v840 = vmul.f32 %v800, 1.442695
        %v841 = vpow.pop %v840
        %v842 = vmul.f32 %v801, 1.442695
        %v843 = vpow.pop %v842
        %v844 = vmul.f32 %v802, 1.442695
        %v845 = vpow.pop %v844
        %v846 = vmul.f32 %v803, 1.442695
        %v847 = vpow.pop %v846
        %v848 = vmul.f32 %v804, 1.442695
        %v849 = vpow.pop %v848
        %v850 = vmul.f32 %v805, 1.442695
        %v851 = vpow.pop %v850
        %v852 = vmul.f32 %v806, 1.442695
        %v853 = vpow.pop %v852
        %v854 = vmul.f32 %v807, 1.442695
        %v855 = vpow.pop %v854
        %v856 = vmul.f32 %v808, 1.442695
        %v857 = vpow.pop %v856
        %v858 = vmul.f32 %v809, 1.442695
        %v859 = vpow.pop %v858
        %v860 = vmul.f32 %v810, 1.442695
        %v861 = vpow.pop %v860
        %v862 = vmul.f32 %v811, 1.442695
        %v863 = vpow.pop %v862
        %v864 = vmul.f32 %v812, 1.442695
        %v865 = vpow.pop %v864
        %v866 = vmul.f32 %v813, 1.442695
        %v867 = vpow.pop %v866
        %v868 = vmul.f32 %v814, 1.442695
        %v869 = vpow.pop %v868
        %v870 = vmul.f32 %v815, 1.442695
        %v871 = vpow.pop %v870
        %v872 = vmul.f32 %v816, 1.442695
        %v873 = vpow.pop %v872
        %v874 = vmul.f32 %v817, 1.442695
        %v875 = vpow.pop %v874
        %v876 = vmul.f32 %v818, 1.442695
        %v877 = vpow.pop %v876
        %v878 = vmul.f32 %v819, 1.442695
        %v879 = vpow.pop %v878
        %v880 = vmul.f32 %v820, 1.442695
        %v881 = vpow.pop %v880
        %v882 = vmul.f32 %v821, 1.442695
        %v883 = vpow.pop %v882
        %v884 = vmul.f32 %v822, 1.442695
        %v885 = vpow.pop %v884
        %v886 = vmul.f32 %v823, 1.442695
        %v887 = vpow.pop %v886
        %v888 = vadd.f32 %v825, %v827
        %889 = vadd.xlane.f32.xlu0 %v888
        %v890 = vpop.xlane.xlu0 %889
        %v891 = vadd.f32 %v829, %v831
        %892 = vadd.xlane.f32.xlu0 %v891
        %v893 = vpop.xlane.xlu0 %892
        %v894 = vadd.f32 %v833, %v835
        %895 = vadd.xlane.f32.xlu0 %v894
        %v896 = vpop.xlane.xlu0 %895
        %v897 = vadd.f32 %v837, %v839
        %898 = vadd.xlane.f32.xlu0 %v897
        %v899 = vpop.xlane.xlu0 %898
        %v900 = vadd.f32 %v841, %v843
        %901 = vadd.xlane.f32.xlu0 %v900
        %v902 = vpop.xlane.xlu0 %901
        %v903 = vadd.f32 %v845, %v847
        %904 = vadd.xlane.f32.xlu0 %v903
        %v905 = vpop.xlane.xlu0 %904
        %v906 = vadd.f32 %v849, %v851
        %907 = vadd.xlane.f32.xlu0 %v906
        %v908 = vpop.xlane.xlu0 %907
        %v909 = vadd.f32 %v853, %v855
        %910 = vadd.xlane.f32.xlu0 %v909
        %v911 = vpop.xlane.xlu0 %910
        %v912 = vadd.f32 %v857, %v859
        %913 = vadd.xlane.f32.xlu0 %v912
        %v914 = vpop.xlane.xlu0 %913
        %v915 = vadd.f32 %v861, %v863
        %916 = vadd.xlane.f32.xlu0 %v915
        %v917 = vpop.xlane.xlu0 %916
        %v918 = vadd.f32 %v865, %v867
        %919 = vadd.xlane.f32.xlu0 %v918
        %v920 = vpop.xlane.xlu0 %919
        %v921 = vadd.f32 %v869, %v871
        %922 = vadd.xlane.f32.xlu0 %v921
        %v923 = vpop.xlane.xlu0 %922
        %v924 = vadd.f32 %v873, %v875
        %925 = vadd.xlane.f32.xlu0 %v924
        %v926 = vpop.xlane.xlu0 %925
        %v927 = vadd.f32 %v877, %v879
        %928 = vadd.xlane.f32.xlu0 %v927
        %v929 = vpop.xlane.xlu0 %928
        %v930 = vadd.f32 %v881, %v883
        %931 = vadd.xlane.f32.xlu0 %v930
        %v932 = vpop.xlane.xlu0 %931
        %v933 = vadd.f32 %v885, %v887
        %934 = vadd.xlane.f32.xlu0 %v933
        %v935 = vpop.xlane.xlu0 %934
        %v936 = vrcp.pop %v890
        %v937 = vrcp.pop %v893
        %v938 = vrcp.pop %v896
        %v939 = vrcp.pop %v899
        %v940 = vrcp.pop %v902
        %v941 = vrcp.pop %v905
        %v942 = vrcp.pop %v908
        %v943 = vrcp.pop %v911
        %v944 = vrcp.pop %v914
        %v945 = vrcp.pop %v917
        %v946 = vrcp.pop %v920
        %v947 = vrcp.pop %v923
        %v948 = vrcp.pop %v926
        %v949 = vrcp.pop %v929
        %v950 = vrcp.pop %v932
        %v951 = vrcp.pop %v935
        %v952 = vmul.f32 %v890, %v936
        %v953 = vmul.f32 %v893, %v937
        %v954 = vmul.f32 %v896, %v938
        %v955 = vmul.f32 %v899, %v939
        %v956 = vmul.f32 %v902, %v940
        %v957 = vmul.f32 %v905, %v941
        %v958 = vmul.f32 %v908, %v942
        %v959 = vmul.f32 %v911, %v943
        %v960 = vmul.f32 %v914, %v944
        %v961 = vmul.f32 %v917, %v945
        %v962 = vmul.f32 %v920, %v946
        %v963 = vmul.f32 %v923, %v947
        %v964 = vmul.f32 %v926, %v948
        %v965 = vmul.f32 %v929, %v949
        %v966 = vmul.f32 %v932, %v950
        %v967 = vmul.f32 %v935, %v951
        %v968 = vsub.f32 2.0, %v952
        %v969 = vsub.f32 2.0, %v953
        %v970 = vsub.f32 2.0, %v954
        %v971 = vsub.f32 2.0, %v955
        %v972 = vsub.f32 2.0, %v956
        %v973 = vsub.f32 2.0, %v957
        %v974 = vsub.f32 2.0, %v958
        %v975 = vsub.f32 2.0, %v959
        %v976 = vsub.f32 2.0, %v960
        %v977 = vsub.f32 2.0, %v961
        %v978 = vsub.f32 2.0, %v962
        %v979 = vsub.f32 2.0, %v963
        %v980 = vsub.f32 2.0, %v964
        %v981 = vsub.f32 2.0, %v965
        %v982 = vsub.f32 2.0, %v966
        %v983 = vsub.f32 2.0, %v967
        %v984 = vmul.f32 %v936, %v968
        %v985 = vmul.f32 %v937, %v969
        %v986 = vmul.f32 %v938, %v970
        %v987 = vmul.f32 %v939, %v971
        %v988 = vmul.f32 %v940, %v972
        %v989 = vmul.f32 %v941, %v973
        %v990 = vmul.f32 %v942, %v974
        %v991 = vmul.f32 %v943, %v975
        %v992 = vmul.f32 %v944, %v976
        %v993 = vmul.f32 %v945, %v977
        %v994 = vmul.f32 %v946, %v978
        %v995 = vmul.f32 %v947, %v979
        %v996 = vmul.f32 %v948, %v980
        %v997 = vmul.f32 %v949, %v981
        %v998 = vmul.f32 %v950, %v982
        %v999 = vmul.f32 %v951, %v983
        %v1000 = vmul.f32 %v825, %v984
        %v1001 = vmul.f32 %v827, %v984
        %v1002 = vmul.f32 %v829, %v985
        %v1003 = vmul.f32 %v831, %v985
        %v1004 = vmul.f32 %v833, %v986
        %v1005 = vmul.f32 %v835, %v986
        %v1006 = vmul.f32 %v837, %v987
        %v1007 = vmul.f32 %v839, %v987
        %v1008 = vmul.f32 %v841, %v988
        %v1009 = vmul.f32 %v843, %v988
        %v1010 = vmul.f32 %v845, %v989
        %v1011 = vmul.f32 %v847, %v989
        %v1012 = vmul.f32 %v849, %v990
        %v1013 = vmul.f32 %v851, %v990
        %v1014 = vmul.f32 %v853, %v991
        %v1015 = vmul.f32 %v855, %v991
        %v1016 = vmul.f32 %v857, %v992
        %v1017 = vmul.f32 %v859, %v992
        %v1018 = vmul.f32 %v861, %v993
        %v1019 = vmul.f32 %v863, %v993
        %v1020 = vmul.f32 %v865, %v994
        %v1021 = vmul.f32 %v867, %v994
        %v1022 = vmul.f32 %v869, %v995
        %v1023 = vmul.f32 %v871, %v995
        %v1024 = vmul.f32 %v873, %v996
        %v1025 = vmul.f32 %v875, %v996
        %v1026 = vmul.f32 %v877, %v997
        %v1027 = vmul.f32 %v879, %v997
        %v1028 = vmul.f32 %v881, %v998
        %v1029 = vmul.f32 %v883, %v998
        %v1030 = vmul.f32 %v885, %v999
        %v1031 = vmul.f32 %v887, %v999
        %v1032 = vpack.c.bf16 %v1002, %v1000
        %v1033 = vpack.c.bf16 %v1003, %v1001
        %v1034 = vpack.c.bf16 %v1006, %v1004
        %v1035 = vpack.c.bf16 %v1007, %v1005
        %v1036 = vpack.c.bf16 %v1010, %v1008
        %v1037 = vpack.c.bf16 %v1011, %v1009
        %v1038 = vpack.c.bf16 %v1014, %v1012
        %v1039 = vpack.c.bf16 %v1015, %v1013
        %v1040 = vpack.c.bf16 %v1018, %v1016
        %v1041 = vpack.c.bf16 %v1019, %v1017
        %v1042 = vpack.c.bf16 %v1022, %v1020
        %v1043 = vpack.c.bf16 %v1023, %v1021
        %v1044 = vpack.c.bf16 %v1026, %v1024
        %v1045 = vpack.c.bf16 %v1027, %v1025
        %v1046 = vpack.c.bf16 %v1030, %v1028
        %v1047 = vpack.c.bf16 %v1031, %v1029
        %v1064 = vunpack.c.l.b16 %v1032
        %v1065 = vunpack.c.l.b16 %v1033
        %v1066 = vunpack.c.h.b16 %v1032
        %v1067 = vunpack.c.h.b16 %v1033
        %v1068 = vunpack.c.l.b16 %v1034
        %v1069 = vunpack.c.l.b16 %v1035
        %v1070 = vunpack.c.h.b16 %v1034
        %v1071 = vunpack.c.h.b16 %v1035
        %v1072 = vunpack.c.l.b16 %v1036
        %v1073 = vunpack.c.l.b16 %v1037
        %v1074 = vunpack.c.h.b16 %v1036
        %v1075 = vunpack.c.h.b16 %v1037
        %v1076 = vunpack.c.l.b16 %v1038
        %v1077 = vunpack.c.l.b16 %v1039
        %v1078 = vunpack.c.h.b16 %v1038
        %v1079 = vunpack.c.h.b16 %v1039
        %v1080 = vunpack.c.l.b16 %v1040
        %v1081 = vunpack.c.l.b16 %v1041
        %v1082 = vunpack.c.h.b16 %v1040
        %v1083 = vunpack.c.h.b16 %v1041
        %v1084 = vunpack.c.l.b16 %v1042
        %v1085 = vunpack.c.l.b16 %v1043
        %v1086 = vunpack.c.h.b16 %v1042
        %v1087 = vunpack.c.h.b16 %v1043
        %v1088 = vunpack.c.l.b16 %v1044
        %v1089 = vunpack.c.l.b16 %v1045
        %v1090 = vunpack.c.h.b16 %v1044
        %v1091 = vunpack.c.h.b16 %v1045
        %v1092 = vunpack.c.l.b16 %v1046
        %v1093 = vunpack.c.l.b16 %v1047
        %v1094 = vunpack.c.h.b16 %v1046
        %v1095 = vunpack.c.h.b16 %v1047
        %v1096 = vpack.c.b16 %v1065, %v1064
        %v1097 = vpack.c.b16 %v1067, %v1066
        %v1098 = vpack.c.b16 %v1069, %v1068
        %v1099 = vpack.c.b16 %v1071, %v1070
        %v1100 = vpack.c.b16 %v1073, %v1072
        %v1101 = vpack.c.b16 %v1075, %v1074
        %v1102 = vpack.c.b16 %v1077, %v1076
        %v1103 = vpack.c.b16 %v1079, %v1078
        %v1104 = vpack.c.b16 %v1081, %v1080
        %v1105 = vpack.c.b16 %v1083, %v1082
        %v1106 = vpack.c.b16 %v1085, %v1084
        %v1107 = vpack.c.b16 %v1087, %v1086
        %v1108 = vpack.c.b16 %v1089, %v1088
        %v1109 = vpack.c.b16 %v1091, %v1090
        %v1110 = vpack.c.b16 %v1093, %v1092
        %v1111 = vpack.c.b16 %v1095, %v1094
        %1128 = vst [vmem:[%s271] sm:$0xff] %v1096
        %1129 = vst [vmem:[%s271 + $0x8] sm:$0xff] %v1097
        %1130 = vst [vmem:[%s271 + $0x10] sm:$0xff] %v1098
        %1131 = vst [vmem:[%s271 + $0x18] sm:$0xff] %v1099
        %1132 = vst [vmem:[%s271 + $0x20] sm:$0xff] %v1100
        %1133 = vst [vmem:[%s271 + $0x28] sm:$0xff] %v1101
        %1134 = vst [vmem:[%s271 + $0x30] sm:$0xff] %v1102
        %1135 = vst [vmem:[%s271 + $0x38] sm:$0xff] %v1103
        %1136 = vst [vmem:[%s271 + $0x40] sm:$0xff] %v1104
        %1137 = vst [vmem:[%s271 + $0x48] sm:$0xff] %v1105
        %1138 = vst [vmem:[%s271 + $0x50] sm:$0xff] %v1106
        %1139 = vst [vmem:[%s271 + $0x58] sm:$0xff] %v1107
        %1140 = vst [vmem:[%s271 + $0x60] sm:$0xff] %v1108
        %1141 = vst [vmem:[%s271 + $0x68] sm:$0xff] %v1109
        %1142 = vst [vmem:[%s271 + $0x70] sm:$0xff] %v1110
        %1143 = vst [vmem:[%s271 + $0x78] sm:$0xff] %v1111
        %1144 = vmatprep.subr.mxu0 %v1001
        %1145 = vmatpush1.xpose.msra.mxu0 %v1000
        %1146 = vmatprep.subr.mxu0 %v1003
        %1147 = vmatpush1.xpose.msra.mxu0 %v1002
        %1148 = vmatprep.subr.mxu0 %v1005
        %1149 = vmatpush1.xpose.msra.mxu0 %v1004
        %1150 = vmatprep.subr.mxu0 %v1007
        %1151 = vmatpush1.xpose.msra.mxu0 %v1006
        %1152 = vmatprep.subr.mxu0 %v1009
        %1153 = vmatpush1.xpose.msra.mxu0 %v1008
        %1154 = vmatprep.subr.mxu0 %v1011
        %1155 = vmatpush1.xpose.msra.mxu0 %v1010
        %1156 = vmatprep.subr.mxu0 %v1013
        %1157 = vmatpush1.xpose.msra.mxu0 %v1012
        %1158 = vmatprep.subr.mxu0 %v1015
        %1159 = vmatpush1.xpose.msra.mxu0 %v1014
        %1160 = vmatprep.subr.mxu0 %v1017
        %1161 = vmatpush1.xpose.msra.mxu0 %v1016
        %1162 = vmatprep.subr.mxu0 %v1019
        %1163 = vmatpush1.xpose.msra.mxu0 %v1018
        %1164 = vmatprep.subr.mxu0 %v1021
        %1165 = vmatpush1.xpose.msra.mxu0 %v1020
        %1166 = vmatprep.subr.mxu0 %v1023
        %1167 = vmatpush1.xpose.msra.mxu0 %v1022
        %1168 = vmatprep.subr.mxu0 %v1025
        %1169 = vmatpush1.xpose.msra.mxu0 %v1024
        %1170 = vmatprep.subr.mxu0 %v1027
        %1171 = vmatpush1.xpose.msra.mxu0 %v1026
        %1172 = vmatprep.subr.mxu0 %v1029
        %1173 = vmatpush1.xpose.msra.mxu0 %v1028
        %1174 = vmatprep.subr.mxu0 %v1031
        %1175 = vmatpush1.xpose.msra.mxu0 %v1030
        %1176 = vmatprep.subr.mxu0 0.0
        %1177 = vmatpush1.xpose.msra.mxu0 0.0
        %1178 = vmatprep.subr.mxu0 0.0
        %1179 = vmatpush1.xpose.msra.mxu0 0.0
        %1180 = vmatprep.subr.mxu0 0.0
        %1181 = vmatpush1.xpose.msra.mxu0 0.0
        %1182 = vmatprep.subr.mxu0 0.0
        %1183 = vmatpush1.xpose.msra.mxu0 0.0
        %1184 = vmatprep.subr.mxu0 0.0
        %1185 = vmatpush1.xpose.msra.mxu0 0.0
        %1186 = vmatprep.subr.mxu0 0.0
        %1187 = vmatpush1.xpose.msra.mxu0 0.0
        %1188 = vmatprep.subr.mxu0 0.0
        %1189 = vmatpush1.xpose.msra.mxu0 0.0
        %1190 = vmatprep.subr.mxu0 0.0
        %1191 = vmatpush1.xpose.msra.mxu0 0.0
        %1192 = vmatprep.subr.mxu0 0.0
        %1193 = vmatpush1.xpose.msra.mxu0 0.0
        %1194 = vmatprep.subr.mxu0 0.0
        %1195 = vmatpush1.xpose.msra.mxu0 0.0
        %1196 = vmatprep.subr.mxu0 0.0
        %1197 = vmatpush1.xpose.msra.mxu0 0.0
        %1198 = vmatprep.subr.mxu0 0.0
        %1199 = vmatpush1.xpose.msra.mxu0 0.0
        %1200 = vmatprep.subr.mxu0 0.0
        %1201 = vmatpush1.xpose.msra.mxu0 0.0
        %1202 = vmatprep.subr.mxu0 0.0
        %1203 = vmatpush1.xpose.msra.mxu0 0.0
        %1204 = vmatprep.subr.mxu0 0.0
        %1205 = vmatpush1.xpose.msra.mxu0 0.0
        %1206 = vmatprep.subr.mxu0 0.0
        %1207 = vmatpush1.xpose.msra.mxu0 0.0
        %1208 = vmatprep.mubr.f32.mxu0 %v501
        %1209 = vmatmul.mubr.f32.gmra.mrb[0].mxu0 %v500
        %v1210 = vpop.f32.mrb[0].mxu0
        %v1211 = vadd.f32 0.0, %v1210
        %v1212 = vpop.f32.mrb[0].mxu0
        %1213 = vdwg.mxu0
        %v1214 = vld [vmem:[%s3] sm:$0xf]
        %v1215 = vld [vmem:[#allocation2 + $0x10] sm:$0xff]
        %v1216 = vld [vmem:[#allocation2 + $0x18] sm:$0xff]
        %v1217 = vld [vmem:[#allocation2 + $0x30] sm:$0xff]
        %v1218 = vld [vmem:[#allocation2 + $0x38] sm:$0xff]
        %1219 = vxpose.xlu0.b32.start [1/16] %v495, 128
        %1220 = vxpose.xlu0.b32.cont [2/16] 0.0, 128
        %1221 = vxpose.xlu0.b32.cont [3/16] 0.0, 128
        %1222 = vxpose.xlu0.b32.cont [4/16] 0.0, 128
        %1223 = vxpose.xlu0.b32.cont [5/16] 0.0, 128
        %1224 = vxpose.xlu0.b32.cont [6/16] 0.0, 128
        %1225 = vxpose.xlu0.b32.cont [7/16] 0.0, 128
        %1226 = vxpose.xlu0.b32.cont [8/16] 0.0, 128
        %1227 = vxpose.xlu0.b32.cont [9/16] 0.0, 128
        %1228 = vxpose.xlu0.b32.cont [10/16] 0.0, 128
        %1229 = vxpose.xlu0.b32.cont [11/16] 0.0, 128
        %1230 = vxpose.xlu0.b32.cont [12/16] 0.0, 128
        %1231 = vxpose.xlu0.b32.cont [13/16] 0.0, 128
        %1232 = vxpose.xlu0.b32.cont [14/16] 0.0, 128
        %1233 = vxpose.xlu0.b32.cont [15/16] 0.0, 128
        %1234 = vxpose.xlu0.b32.end [16/16] 0.0, 128
        %v1235 = vpop.trf.xlu0
        %v1236 = vpop.trf.xlu0
        %v1237 = vpop.trf.xlu0
        %v1238 = vpop.trf.xlu0
        %v1239 = vpop.trf.xlu0
        %v1240 = vpop.trf.xlu0
        %v1241 = vpop.trf.xlu0
        %v1242 = vpop.trf.xlu0
        %v1243 = vpop.trf.xlu0
        %v1244 = vpop.trf.xlu0
        %v1245 = vpop.trf.xlu0
        %v1246 = vpop.trf.xlu0
        %v1247 = vpop.trf.xlu0
        %v1248 = vpop.trf.xlu0
        %v1249 = vpop.trf.xlu0
        %v1250 = vpop.trf.xlu0
        %v1252 = vsel %vm534, %v1235, 0
        %v1255 = vsel %vm534, %v1236, 0
        %v1258 = vsel %vm534, %v1237, 0
        %v1261 = vsel %vm534, %v1238, 0
        %v1264 = vsel %vm534, %v1239, 0
        %v1267 = vsel %vm534, %v1240, 0
        %v1270 = vsel %vm534, %v1241, 0
        %v1273 = vsel %vm534, %v1242, 0
        %v1276 = vsel %vm534, %v1243, 0
        %v1279 = vsel %vm534, %v1244, 0
        %v1282 = vsel %vm534, %v1245, 0
        %v1285 = vsel %vm534, %v1246, 0
        %v1288 = vsel %vm534, %v1247, 0
        %v1291 = vsel %vm534, %v1248, 0
        %v1294 = vsel %vm534, %v1249, 0
        %v1297 = vsel %vm534, %v1250, 0
        %1299 = vmatprep.subr.mxu0 %v1216
        %1300 = vmatpush1.msra.mxu0 %v1215
        %1301 = vmatprep.subr.mxu0 0.0
        %1302 = vmatpush1.msra.mxu0 0.0
        %1303 = vmatprep.subr.mxu0 0.0
        %1304 = vmatpush1.msra.mxu0 0.0
        %1305 = vmatprep.subr.mxu0 0.0
        %1306 = vmatpush1.msra.mxu0 0.0
        %1307 = vmatprep.subr.mxu0 0.0
        %1308 = vmatpush1.msra.mxu0 0.0
        %1309 = vmatprep.subr.mxu0 0.0
        %1310 = vmatpush1.msra.mxu0 0.0
        %1311 = vmatprep.subr.mxu0 0.0
        %1312 = vmatpush1.msra.mxu0 0.0
        %1313 = vmatprep.subr.mxu0 0.0
        %1314 = vmatpush1.msra.mxu0 0.0
        %1315 = vmatprep.subr.mxu0 0.0
        %1316 = vmatpush1.msra.mxu0 0.0
        %1317 = vmatprep.subr.mxu0 0.0
        %1318 = vmatpush1.msra.mxu0 0.0
        %1319 = vmatprep.subr.mxu0 0.0
        %1320 = vmatpush1.msra.mxu0 0.0
        %1321 = vmatprep.subr.mxu0 0.0
        %1322 = vmatpush1.msra.mxu0 0.0
        %1323 = vmatprep.subr.mxu0 0.0
        %1324 = vmatpush1.msra.mxu0 0.0
        %1325 = vmatprep.subr.mxu0 0.0
        %1326 = vmatpush1.msra.mxu0 0.0
        %1327 = vmatprep.subr.mxu0 0.0
        %1328 = vmatpush1.msra.mxu0 0.0
        %1329 = vmatprep.subr.mxu0 0.0
        %1330 = vmatpush1.msra.mxu0 0.0
        %1331 = vmatprep.subr.mxu0 0.0
        %1332 = vmatpush1.msra.mxu0 0.0
        %1333 = vmatprep.subr.mxu0 0.0
        %1334 = vmatpush1.msra.mxu0 0.0
        %1335 = vmatprep.subr.mxu0 0.0
        %1336 = vmatpush1.msra.mxu0 0.0
        %1337 = vmatprep.subr.mxu0 0.0
        %1338 = vmatpush1.msra.mxu0 0.0
        %1339 = vmatprep.subr.mxu0 0.0
        %1340 = vmatpush1.msra.mxu0 0.0
        %1341 = vmatprep.subr.mxu0 0.0
        %1342 = vmatpush1.msra.mxu0 0.0
        %1343 = vmatprep.subr.mxu0 0.0
        %1344 = vmatpush1.msra.mxu0 0.0
        %1345 = vmatprep.subr.mxu0 0.0
        %1346 = vmatpush1.msra.mxu0 0.0
        %1347 = vmatprep.subr.mxu0 0.0
        %1348 = vmatpush1.msra.mxu0 0.0
        %1349 = vmatprep.subr.mxu0 0.0
        %1350 = vmatpush1.msra.mxu0 0.0
        %1351 = vmatprep.subr.mxu0 0.0
        %1352 = vmatpush1.msra.mxu0 0.0
        %1353 = vmatprep.subr.mxu0 0.0
        %1354 = vmatpush1.msra.mxu0 0.0
        %1355 = vmatprep.subr.mxu0 0.0
        %1356 = vmatpush1.msra.mxu0 0.0
        %1357 = vmatprep.subr.mxu0 0.0
        %1358 = vmatpush1.msra.mxu0 0.0
        %1359 = vmatprep.subr.mxu0 0.0
        %1360 = vmatpush1.msra.mxu0 0.0
        %1361 = vmatprep.subr.mxu0 0.0
        %1362 = vmatpush1.msra.mxu0 0.0
        %1363 = vmatprep.mubr.f32.mxu0 0.0
        %1364 = vmatmul.mubr.f32.gmra.mrb[0].mxu0 %v1252
        %v1365 = vpop.f32.mrb[0].mxu0
        %v1366 = vadd.f32 0.0, %v1365
        %v1367 = vpop.f32.mrb[0].mxu0
        %v1368 = vadd.f32 0.0, %v1367
        %1369 = vmatprep.mubr.f32.mxu0 0.0
        %1370 = vmatmul.mubr.f32.gmra.mrb[0].mxu0 %v1255
        %v1371 = vpop.f32.mrb[0].mxu0
        %v1372 = vadd.f32 0.0, %v1371
        %v1373 = vpop.f32.mrb[0].mxu0
        %v1374 = vadd.f32 0.0, %v1373
        %1375 = vmatprep.mubr.f32.mxu0 0.0
        %1376 = vmatmul.mubr.f32.gmra.mrb[0].mxu0 %v1258
        %v1377 = vpop.f32.mrb[0].mxu0
        %v1378 = vadd.f32 0.0, %v1377
        %v1379 = vpop.f32.mrb[0].mxu0
        %v1380 = vadd.f32 0.0, %v1379
        %1381 = vmatprep.mubr.f32.mxu0 0.0
        %1382 = vmatmul.mubr.f32.gmra.mrb[0].mxu0 %v1261
        %v1383 = vpop.f32.mrb[0].mxu0
        %v1384 = vadd.f32 0.0, %v1383
        %v1385 = vpop.f32.mrb[0].mxu0
        %v1386 = vadd.f32 0.0, %v1385
        %1387 = vmatprep.mubr.f32.mxu0 0.0
        %1388 = vmatmul.mubr.f32.gmra.mrb[0].mxu0 %v1264
        %v1389 = vpop.f32.mrb[0].mxu0
        %v1390 = vadd.f32 0.0, %v1389
        %v1391 = vpop.f32.mrb[0].mxu0
        %v1392 = vadd.f32 0.0, %v1391
        %1393 = vmatprep.mubr.f32.mxu0 0.0
        %1394 = vmatmul.mubr.f32.gmra.mrb[0].mxu0 %v1267
        %v1395 = vpop.f32.mrb[0].mxu0
        %v1396 = vadd.f32 0.0, %v1395
        %v1397 = vpop.f32.mrb[0].mxu0
        %v1398 = vadd.f32 0.0, %v1397
        %1399 = vmatprep.mubr.f32.mxu0 0.0
        %1400 = vmatmul.mubr.f32.gmra.mrb[0].mxu0 %v1270
        %v1401 = vpop.f32.mrb[0].mxu0
        %v1402 = vadd.f32 0.0, %v1401
        %v1403 = vpop.f32.mrb[0].mxu0
        %v1404 = vadd.f32 0.0, %v1403
        %1405 = vmatprep.mubr.f32.mxu0 0.0
        %1406 = vmatmul.mubr.f32.gmra.mrb[0].mxu0 %v1273
        %v1407 = vpop.f32.mrb[0].mxu0
        %v1408 = vadd.f32 0.0, %v1407
        %v1409 = vpop.f32.mrb[0].mxu0
        %v1410 = vadd.f32 0.0, %v1409
        %1411 = vmatprep.mubr.f32.mxu0 0.0
        %1412 = vmatmul.mubr.f32.gmra.mrb[0].mxu0 %v1276
        %v1413 = vpop.f32.mrb[0].mxu0
        %v1414 = vadd.f32 0.0, %v1413
        %v1415 = vpop.f32.mrb[0].mxu0
        %v1416 = vadd.f32 0.0, %v1415
        %1417 = vmatprep.mubr.f32.mxu0 0.0
        %1418 = vmatmul.mubr.f32.gmra.mrb[0].mxu0 %v1279
        %v1419 = vpop.f32.mrb[0].mxu0
        %v1420 = vadd.f32 0.0, %v1419
        %v1421 = vpop.f32.mrb[0].mxu0
        %v1422 = vadd.f32 0.0, %v1421
        %1423 = vmatprep.mubr.f32.mxu0 0.0
        %1424 = vmatmul.mubr.f32.gmra.mrb[0].mxu0 %v1282
        %v1425 = vpop.f32.mrb[0].mxu0
        %v1426 = vadd.f32 0.0, %v1425
        %v1427 = vpop.f32.mrb[0].mxu0
        %v1428 = vadd.f32 0.0, %v1427
        %1429 = vmatprep.mubr.f32.mxu0 0.0
        %1430 = vmatmul.mubr.f32.gmra.mrb[0].mxu0 %v1285
        %v1431 = vpop.f32.mrb[0].mxu0
        %v1432 = vadd.f32 0.0, %v1431
        %v1433 = vpop.f32.mrb[0].mxu0
        %v1434 = vadd.f32 0.0, %v1433
        %1435 = vmatprep.mubr.f32.mxu0 0.0
        %1436 = vmatmul.mubr.f32.gmra.mrb[0].mxu0 %v1288
        %v1437 = vpop.f32.mrb[0].mxu0
        %v1438 = vadd.f32 0.0, %v1437
        %v1439 = vpop.f32.mrb[0].mxu0
        %v1440 = vadd.f32 0.0, %v1439
        %1441 = vmatprep.mubr.f32.mxu0 0.0
        %1442 = vmatmul.mubr.f32.gmra.mrb[0].mxu0 %v1291
        %v1443 = vpop.f32.mrb[0].mxu0
        %v1444 = vadd.f32 0.0, %v1443
        %v1445 = vpop.f32.mrb[0].mxu0
        %v1446 = vadd.f32 0.0, %v1445
        %1447 = vmatprep.mubr.f32.mxu0 0.0
        %1448 = vmatmul.mubr.f32.gmra.mrb[0].mxu0 %v1294
        %v1449 = vpop.f32.mrb[0].mxu0
        %v1450 = vadd.f32 0.0, %v1449
        %v1451 = vpop.f32.mrb[0].mxu0
        %v1452 = vadd.f32 0.0, %v1451
        %1453 = vmatprep.mubr.f32.mxu0 0.0
        %1454 = vmatmul.mubr.f32.gmra.mrb[0].mxu0 %v1297
        %v1455 = vpop.f32.mrb[0].mxu0
        %v1456 = vadd.f32 0.0, %v1455
        %v1457 = vpop.f32.mrb[0].mxu0
        %v1458 = vadd.f32 0.0, %v1457
        %1459 = vdwg.mxu0
        %v1460 = vmax.f32 %v1366, %v1368
        %1461 = vmax.xlane.f32.xlu0 %v1460
        %v1462 = vpop.xlane.xlu0 %1461
        %v1463 = vmax.f32 %v1372, %v1374
        %1464 = vmax.xlane.f32.xlu0 %v1463
        %v1465 = vpop.xlane.xlu0 %1464
        %v1466 = vmax.f32 %v1378, %v1380
        %1467 = vmax.xlane.f32.xlu0 %v1466
        %v1468 = vpop.xlane.xlu0 %1467
        %v1469 = vmax.f32 %v1384, %v1386
        %1470 = vmax.xlane.f32.xlu0 %v1469
        %v1471 = vpop.xlane.xlu0 %1470
        %v1472 = vmax.f32 %v1390, %v1392
        %1473 = vmax.xlane.f32.xlu0 %v1472
        %v1474 = vpop.xlane.xlu0 %1473
        %v1475 = vmax.f32 %v1396, %v1398
        %1476 = vmax.xlane.f32.xlu0 %v1475
        %v1477 = vpop.xlane.xlu0 %1476
        %v1478 = vmax.f32 %v1402, %v1404
        %1479 = vmax.xlane.f32.xlu0 %v1478
        %v1480 = vpop.xlane.xlu0 %1479
        %v1481 = vmax.f32 %v1408, %v1410
        %1482 = vmax.xlane.f32.xlu0 %v1481
        %v1483 = vpop.xlane.xlu0 %1482
        %v1484 = vmax.f32 %v1414, %v1416
        %1485 = vmax.xlane.f32.xlu0 %v1484
        %v1486 = vpop.xlane.xlu0 %1485
        %v1487 = vmax.f32 %v1420, %v1422
        %1488 = vmax.xlane.f32.xlu0 %v1487
        %v1489 = vpop.xlane.xlu0 %1488
        %v1490 = vmax.f32 %v1426, %v1428
        %1491 = vmax.xlane.f32.xlu0 %v1490
        %v1492 = vpop.xlane.xlu0 %1491
        %v1493 = vmax.f32 %v1432, %v1434
        %1494 = vmax.xlane.f32.xlu0 %v1493
        %v1495 = vpop.xlane.xlu0 %1494
        %v1496 = vmax.f32 %v1438, %v1440
        %1497 = vmax.xlane.f32.xlu0 %v1496
        %v1498 = vpop.xlane.xlu0 %1497
        %v1499 = vmax.f32 %v1444, %v1446
        %1500 = vmax.xlane.f32.xlu0 %v1499
        %v1501 = vpop.xlane.xlu0 %1500
        %v1502 = vmax.f32 %v1450, %v1452
        %1503 = vmax.xlane.f32.xlu0 %v1502
        %v1504 = vpop.xlane.xlu0 %1503
        %v1505 = vmax.f32 %v1456, %v1458
        %1506 = vmax.xlane.f32.xlu0 %v1505
        %v1507 = vpop.xlane.xlu0 %1506
        %v1508 = vsub.f32 %v1366, %v1462
        %v1509 = vsub.f32 %v1368, %v1462
        %v1510 = vsub.f32 %v1372, %v1465
        %v1511 = vsub.f32 %v1374, %v1465
        %v1512 = vsub.f32 %v1378, %v1468
        %v1513 = vsub.f32 %v1380, %v1468
        %v1514 = vsub.f32 %v1384, %v1471
        %v1515 = vsub.f32 %v1386, %v1471
        %v1516 = vsub.f32 %v1390, %v1474
        %v1517 = vsub.f32 %v1392, %v1474
        %v1518 = vsub.f32 %v1396, %v1477
        %v1519 = vsub.f32 %v1398, %v1477
        %v1520 = vsub.f32 %v1402, %v1480
        %v1521 = vsub.f32 %v1404, %v1480
        %v1522 = vsub.f32 %v1408, %v1483
        %v1523 = vsub.f32 %v1410, %v1483
        %v1524 = vsub.f32 %v1414, %v1486
        %v1525 = vsub.f32 %v1416, %v1486
        %v1526 = vsub.f32 %v1420, %v1489
        %v1527 = vsub.f32 %v1422, %v1489
        %v1528 = vsub.f32 %v1426, %v1492
        %v1529 = vsub.f32 %v1428, %v1492
        %v1530 = vsub.f32 %v1432, %v1495
        %v1531 = vsub.f32 %v1434, %v1495
        %v1532 = vsub.f32 %v1438, %v1498
        %v1533 = vsub.f32 %v1440, %v1498
        %v1534 = vsub.f32 %v1444, %v1501
        %v1535 = vsub.f32 %v1446, %v1501
        %v1536 = vsub.f32 %v1450, %v1504
        %v1537 = vsub.f32 %v1452, %v1504
        %v1538 = vsub.f32 %v1456, %v1507
        %v1539 = vsub.f32 %v1458, %v1507
        %v1540 = vmul.f32 %v1508, 1.442695
        %v1541 = vpow.pop %v1540
        %v1542 = vmul.f32 %v1509, 1.442695
        %v1543 = vpow.pop %v1542
        %v1544 = vmul.f32 %v1510, 1.442695
        %v1545 = vpow.pop %v1544
        %v1546 = vmul.f32 %v1511, 1.442695
        %v1547 = vpow.pop %v1546
        %v1548 = vmul.f32 %v1512, 1.442695
        %v1549 = vpow.pop %v1548
        %v1550 = vmul.f32 %v1513, 1.442695
        %v1551 = vpow.pop %v1550
        %v1552 = vmul.f32 %v1514, 1.442695
        %v1553 = vpow.pop %v1552
        %v1554 = vmul.f32 %v1515, 1.442695
        %v1555 = vpow.pop %v1554
        %v1556 = vmul.f32 %v1516, 1.442695
        %v1557 = vpow.pop %v1556
        %v1558 = vmul.f32 %v1517, 1.442695
        %v1559 = vpow.pop %v1558
        %v1560 = vmul.f32 %v1518, 1.442695
        %v1561 = vpow.pop %v1560
        %v1562 = vmul.f32 %v1519, 1.442695
        %v1563 = vpow.pop %v1562
        %v1564 = vmul.f32 %v1520, 1.442695
        %v1565 = vpow.pop %v1564
        %v1566 = vmul.f32 %v1521, 1.442695
        %v1567 = vpow.pop %v1566
        %v1568 = vmul.f32 %v1522, 1.442695
        %v1569 = vpow.pop %v1568
        %v1570 = vmul.f32 %v1523, 1.442695
        %v1571 = vpow.pop %v1570
        %v1572 = vmul.f32 %v1524, 1.442695
        %v1573 = vpow.pop %v1572
        %v1574 = vmul.f32 %v1525, 1.442695
        %v1575 = vpow.pop %v1574
        %v1576 = vmul.f32 %v1526, 1.442695
        %v1577 = vpow.pop %v1576
        %v1578 = vmul.f32 %v1527, 1.442695
        %v1579 = vpow.pop %v1578
        %v1580 = vmul.f32 %v1528, 1.442695
        %v1581 = vpow.pop %v1580
        %v1582 = vmul.f32 %v1529, 1.442695
        %v1583 = vpow.pop %v1582
        %v1584 = vmul.f32 %v1530, 1.442695
        %v1585 = vpow.pop %v1584
        %v1586 = vmul.f32 %v1531, 1.442695
        %v1587 = vpow.pop %v1586
        %v1588 = vmul.f32 %v1532, 1.442695
        %v1589 = vpow.pop %v1588
        %v1590 = vmul.f32 %v1533, 1.442695
        %v1591 = vpow.pop %v1590
        %v1592 = vmul.f32 %v1534, 1.442695
        %v1593 = vpow.pop %v1592
        %v1594 = vmul.f32 %v1535, 1.442695
        %v1595 = vpow.pop %v1594
        %v1596 = vmul.f32 %v1536, 1.442695
        %v1597 = vpow.pop %v1596
        %v1598 = vmul.f32 %v1537, 1.442695
        %v1599 = vpow.pop %v1598
        %v1600 = vmul.f32 %v1538, 1.442695
        %v1601 = vpow.pop %v1600
        %v1602 = vmul.f32 %v1539, 1.442695
        %v1603 = vpow.pop %v1602
        %v1604 = vadd.f32 %v1541, %v1543
        %1605 = vadd.xlane.f32.xlu0 %v1604
        %v1606 = vpop.xlane.xlu0 %1605
        %v1607 = vadd.f32 %v1545, %v1547
        %1608 = vadd.xlane.f32.xlu0 %v1607
        %v1609 = vpop.xlane.xlu0 %1608
        %v1610 = vadd.f32 %v1549, %v1551
        %1611 = vadd.xlane.f32.xlu0 %v1610
        %v1612 = vpop.xlane.xlu0 %1611
        %v1613 = vadd.f32 %v1553, %v1555
        %1614 = vadd.xlane.f32.xlu0 %v1613
        %v1615 = vpop.xlane.xlu0 %1614
        %v1616 = vadd.f32 %v1557, %v1559
        %1617 = vadd.xlane.f32.xlu0 %v1616
        %v1618 = vpop.xlane.xlu0 %1617
        %v1619 = vadd.f32 %v1561, %v1563
        %1620 = vadd.xlane.f32.xlu0 %v1619
        %v1621 = vpop.xlane.xlu0 %1620
        %v1622 = vadd.f32 %v1565, %v1567
        %1623 = vadd.xlane.f32.xlu0 %v1622
        %v1624 = vpop.xlane.xlu0 %1623
        %v1625 = vadd.f32 %v1569, %v1571
        %1626 = vadd.xlane.f32.xlu0 %v1625
        %v1627 = vpop.xlane.xlu0 %1626
        %v1628 = vadd.f32 %v1573, %v1575
        %1629 = vadd.xlane.f32.xlu0 %v1628
        %v1630 = vpop.xlane.xlu0 %1629
        %v1631 = vadd.f32 %v1577, %v1579
        %1632 = vadd.xlane.f32.xlu0 %v1631
        %v1633 = vpop.xlane.xlu0 %1632
        %v1634 = vadd.f32 %v1581, %v1583
        %1635 = vadd.xlane.f32.xlu0 %v1634
        %v1636 = vpop.xlane.xlu0 %1635
        %v1637 = vadd.f32 %v1585, %v1587
        %1638 = vadd.xlane.f32.xlu0 %v1637
        %v1639 = vpop.xlane.xlu0 %1638
        %v1640 = vadd.f32 %v1589, %v1591
        %1641 = vadd.xlane.f32.xlu0 %v1640
        %v1642 = vpop.xlane.xlu0 %1641
        %v1643 = vadd.f32 %v1593, %v1595
        %1644 = vadd.xlane.f32.xlu0 %v1643
        %v1645 = vpop.xlane.xlu0 %1644
        %v1646 = vadd.f32 %v1597, %v1599
        %1647 = vadd.xlane.f32.xlu0 %v1646
        %v1648 = vpop.xlane.xlu0 %1647
        %v1649 = vadd.f32 %v1601, %v1603
        %1650 = vadd.xlane.f32.xlu0 %v1649
        %v1651 = vpop.xlane.xlu0 %1650
        %v1652 = vrcp.pop %v1606
        %v1653 = vrcp.pop %v1609
        %v1654 = vrcp.pop %v1612
        %v1655 = vrcp.pop %v1615
        %v1656 = vrcp.pop %v1618
        %v1657 = vrcp.pop %v1621
        %v1658 = vrcp.pop %v1624
        %v1659 = vrcp.pop %v1627
        %v1660 = vrcp.pop %v1630
        %v1661 = vrcp.pop %v1633
        %v1662 = vrcp.pop %v1636
        %v1663 = vrcp.pop %v1639
        %v1664 = vrcp.pop %v1642
        %v1665 = vrcp.pop %v1645
        %v1666 = vrcp.pop %v1648
        %v1667 = vrcp.pop %v1651
        %v1668 = vmul.f32 %v1606, %v1652
        %v1669 = vmul.f32 %v1609, %v1653
        %v1670 = vmul.f32 %v1612, %v1654
        %v1671 = vmul.f32 %v1615, %v1655
        %v1672 = vmul.f32 %v1618, %v1656
        %v1673 = vmul.f32 %v1621, %v1657
        %v1674 = vmul.f32 %v1624, %v1658
        %v1675 = vmul.f32 %v1627, %v1659
        %v1676 = vmul.f32 %v1630, %v1660
        %v1677 = vmul.f32 %v1633, %v1661
        %v1678 = vmul.f32 %v1636, %v1662
        %v1679 = vmul.f32 %v1639, %v1663
        %v1680 = vmul.f32 %v1642, %v1664
        %v1681 = vmul.f32 %v1645, %v1665
        %v1682 = vmul.f32 %v1648, %v1666
        %v1683 = vmul.f32 %v1651, %v1667
        %v1684 = vsub.f32 2.0, %v1668
        %v1685 = vsub.f32 2.0, %v1669
        %v1686 = vsub.f32 2.0, %v1670
        %v1687 = vsub.f32 2.0, %v1671
        %v1688 = vsub.f32 2.0, %v1672
        %v1689 = vsub.f32 2.0, %v1673
        %v1690 = vsub.f32 2.0, %v1674
        %v1691 = vsub.f32 2.0, %v1675
        %v1692 = vsub.f32 2.0, %v1676
        %v1693 = vsub.f32 2.0, %v1677
        %v1694 = vsub.f32 2.0, %v1678
        %v1695 = vsub.f32 2.0, %v1679
        %v1696 = vsub.f32 2.0, %v1680
        %v1697 = vsub.f32 2.0, %v1681
        %v1698 = vsub.f32 2.0, %v1682
        %v1699 = vsub.f32 2.0, %v1683
        %v1700 = vmul.f32 %v1652, %v1684
        %v1701 = vmul.f32 %v1653, %v1685
        %v1702 = vmul.f32 %v1654, %v1686
        %v1703 = vmul.f32 %v1655, %v1687
        %v1704 = vmul.f32 %v1656, %v1688
        %v1705 = vmul.f32 %v1657, %v1689
        %v1706 = vmul.f32 %v1658, %v1690
        %v1707 = vmul.f32 %v1659, %v1691
        %v1708 = vmul.f32 %v1660, %v1692
        %v1709 = vmul.f32 %v1661, %v1693
        %v1710 = vmul.f32 %v1662, %v1694
        %v1711 = vmul.f32 %v1663, %v1695
        %v1712 = vmul.f32 %v1664, %v1696
        %v1713 = vmul.f32 %v1665, %v1697
        %v1714 = vmul.f32 %v1666, %v1698
        %v1715 = vmul.f32 %v1667, %v1699
        %v1716 = vmul.f32 %v1541, %v1700
        %v1717 = vmul.f32 %v1543, %v1700
        %v1718 = vmul.f32 %v1545, %v1701
        %v1719 = vmul.f32 %v1547, %v1701
        %v1720 = vmul.f32 %v1549, %v1702
        %v1721 = vmul.f32 %v1551, %v1702
        %v1722 = vmul.f32 %v1553, %v1703
        %v1723 = vmul.f32 %v1555, %v1703
        %v1724 = vmul.f32 %v1557, %v1704
        %v1725 = vmul.f32 %v1559, %v1704
        %v1726 = vmul.f32 %v1561, %v1705
        %v1727 = vmul.f32 %v1563, %v1705
        %v1728 = vmul.f32 %v1565, %v1706
        %v1729 = vmul.f32 %v1567, %v1706
        %v1730 = vmul.f32 %v1569, %v1707
        %v1731 = vmul.f32 %v1571, %v1707
        %v1732 = vmul.f32 %v1573, %v1708
        %v1733 = vmul.f32 %v1575, %v1708
        %v1734 = vmul.f32 %v1577, %v1709
        %v1735 = vmul.f32 %v1579, %v1709
        %v1736 = vmul.f32 %v1581, %v1710
        %v1737 = vmul.f32 %v1583, %v1710
        %v1738 = vmul.f32 %v1585, %v1711
        %v1739 = vmul.f32 %v1587, %v1711
        %v1740 = vmul.f32 %v1589, %v1712
        %v1741 = vmul.f32 %v1591, %v1712
        %v1742 = vmul.f32 %v1593, %v1713
        %v1743 = vmul.f32 %v1595, %v1713
        %v1744 = vmul.f32 %v1597, %v1714
        %v1745 = vmul.f32 %v1599, %v1714
        %v1746 = vmul.f32 %v1601, %v1715
        %v1747 = vmul.f32 %v1603, %v1715
        %v1748 = vpack.c.bf16 %v1718, %v1716
        %v1749 = vpack.c.bf16 %v1719, %v1717
        %v1750 = vpack.c.bf16 %v1722, %v1720
        %v1751 = vpack.c.bf16 %v1723, %v1721
        %v1752 = vpack.c.bf16 %v1726, %v1724
        %v1753 = vpack.c.bf16 %v1727, %v1725
        %v1754 = vpack.c.bf16 %v1730, %v1728
        %v1755 = vpack.c.bf16 %v1731, %v1729
        %v1756 = vpack.c.bf16 %v1734, %v1732
        %v1757 = vpack.c.bf16 %v1735, %v1733
        %v1758 = vpack.c.bf16 %v1738, %v1736
        %v1759 = vpack.c.bf16 %v1739, %v1737
        %v1760 = vpack.c.bf16 %v1742, %v1740
        %v1761 = vpack.c.bf16 %v1743, %v1741
        %v1762 = vpack.c.bf16 %v1746, %v1744
        %v1763 = vpack.c.bf16 %v1747, %v1745
        %v1780 = vunpack.c.l.b16 %v1748
        %v1781 = vunpack.c.l.b16 %v1749
        %v1782 = vunpack.c.h.b16 %v1748
        %v1783 = vunpack.c.h.b16 %v1749
        %v1784 = vunpack.c.l.b16 %v1750
        %v1785 = vunpack.c.l.b16 %v1751
        %v1786 = vunpack.c.h.b16 %v1750
        %v1787 = vunpack.c.h.b16 %v1751
        %v1788 = vunpack.c.l.b16 %v1752
        %v1789 = vunpack.c.l.b16 %v1753
        %v1790 = vunpack.c.h.b16 %v1752
        %v1791 = vunpack.c.h.b16 %v1753
        %v1792 = vunpack.c.l.b16 %v1754
        %v1793 = vunpack.c.l.b16 %v1755
        %v1794 = vunpack.c.h.b16 %v1754
        %v1795 = vunpack.c.h.b16 %v1755
        %v1796 = vunpack.c.l.b16 %v1756
        %v1797 = vunpack.c.l.b16 %v1757
        %v1798 = vunpack.c.h.b16 %v1756
        %v1799 = vunpack.c.h.b16 %v1757
        %v1800 = vunpack.c.l.b16 %v1758
        %v1801 = vunpack.c.l.b16 %v1759
        %v1802 = vunpack.c.h.b16 %v1758
        %v1803 = vunpack.c.h.b16 %v1759
        %v1804 = vunpack.c.l.b16 %v1760
        %v1805 = vunpack.c.l.b16 %v1761
        %v1806 = vunpack.c.h.b16 %v1760
        %v1807 = vunpack.c.h.b16 %v1761
        %v1808 = vunpack.c.l.b16 %v1762
        %v1809 = vunpack.c.l.b16 %v1763
        %v1810 = vunpack.c.h.b16 %v1762
        %v1811 = vunpack.c.h.b16 %v1763
        %v1812 = vpack.c.b16 %v1781, %v1780
        %v1813 = vpack.c.b16 %v1783, %v1782
        %v1814 = vpack.c.b16 %v1785, %v1784
        %v1815 = vpack.c.b16 %v1787, %v1786
        %v1816 = vpack.c.b16 %v1789, %v1788
        %v1817 = vpack.c.b16 %v1791, %v1790
        %v1818 = vpack.c.b16 %v1793, %v1792
        %v1819 = vpack.c.b16 %v1795, %v1794
        %v1820 = vpack.c.b16 %v1797, %v1796
        %v1821 = vpack.c.b16 %v1799, %v1798
        %v1822 = vpack.c.b16 %v1801, %v1800
        %v1823 = vpack.c.b16 %v1803, %v1802
        %v1824 = vpack.c.b16 %v1805, %v1804
        %v1825 = vpack.c.b16 %v1807, %v1806
        %v1826 = vpack.c.b16 %v1809, %v1808
        %v1827 = vpack.c.b16 %v1811, %v1810
        %s1844 = scalar_lea.vmem %s271, 128 [#allocation5]
        %1845 = vst [vmem:[%s1844] sm:$0xff] %v1812
        %1846 = vst [vmem:[%s1844 + $0x8] sm:$0xff] %v1813
        %1847 = vst [vmem:[%s1844 + $0x10] sm:$0xff] %v1814
        %1848 = vst [vmem:[%s1844 + $0x18] sm:$0xff] %v1815
        %1849 = vst [vmem:[%s1844 + $0x20] sm:$0xff] %v1816
        %1850 = vst [vmem:[%s1844 + $0x28] sm:$0xff] %v1817
        %1851 = vst [vmem:[%s1844 + $0x30] sm:$0xff] %v1818
        %1852 = vst [vmem:[%s1844 + $0x38] sm:$0xff] %v1819
        %1853 = vst [vmem:[%s1844 + $0x40] sm:$0xff] %v1820
        %1854 = vst [vmem:[%s1844 + $0x48] sm:$0xff] %v1821
        %1855 = vst [vmem:[%s1844 + $0x50] sm:$0xff] %v1822
        %1856 = vst [vmem:[%s1844 + $0x58] sm:$0xff] %v1823
        %1857 = vst [vmem:[%s1844 + $0x60] sm:$0xff] %v1824
        %1858 = vst [vmem:[%s1844 + $0x68] sm:$0xff] %v1825
        %1859 = vst [vmem:[%s1844 + $0x70] sm:$0xff] %v1826
        %1860 = vst [vmem:[%s1844 + $0x78] sm:$0xff] %v1827
        %1861 = vmatprep.subr.mxu0 %v1717
        %1862 = vmatpush1.xpose.msra.mxu0 %v1716
        %1863 = vmatprep.subr.mxu0 %v1719
        %1864 = vmatpush1.xpose.msra.mxu0 %v1718
        %1865 = vmatprep.subr.mxu0 %v1721
        %1866 = vmatpush1.xpose.msra.mxu0 %v1720
        %1867 = vmatprep.subr.mxu0 %v1723
        %1868 = vmatpush1.xpose.msra.mxu0 %v1722
        %1869 = vmatprep.subr.mxu0 %v1725
        %1870 = vmatpush1.xpose.msra.mxu0 %v1724
        %1871 = vmatprep.subr.mxu0 %v1727
        %1872 = vmatpush1.xpose.msra.mxu0 %v1726
        %1873 = vmatprep.subr.mxu0 %v1729
        %1874 = vmatpush1.xpose.msra.mxu0 %v1728
        %1875 = vmatprep.subr.mxu0 %v1731
        %1876 = vmatpush1.xpose.msra.mxu0 %v1730
        %1877 = vmatprep.subr.mxu0 %v1733
        %1878 = vmatpush1.xpose.msra.mxu0 %v1732
        %1879 = vmatprep.subr.mxu0 %v1735
        %1880 = vmatpush1.xpose.msra.mxu0 %v1734
        %1881 = vmatprep.subr.mxu0 %v1737
        %1882 = vmatpush1.xpose.msra.mxu0 %v1736
        %1883 = vmatprep.subr.mxu0 %v1739
        %1884 = vmatpush1.xpose.msra.mxu0 %v1738
        %1885 = vmatprep.subr.mxu0 %v1741
        %1886 = vmatpush1.xpose.msra.mxu0 %v1740
        %1887 = vmatprep.subr.mxu0 %v1743
        %1888 = vmatpush1.xpose.msra.mxu0 %v1742
        %1889 = vmatprep.subr.mxu0 %v1745
        %1890 = vmatpush1.xpose.msra.mxu0 %v1744
        %1891 = vmatprep.subr.mxu0 %v1747
        %1892 = vmatpush1.xpose.msra.mxu0 %v1746
        %1893 = vmatprep.subr.mxu0 0.0
        %1894 = vmatpush1.xpose.msra.mxu0 0.0
        %1895 = vmatprep.subr.mxu0 0.0
        %1896 = vmatpush1.xpose.msra.mxu0 0.0
        %1897 = vmatprep.subr.mxu0 0.0
        %1898 = vmatpush1.xpose.msra.mxu0 0.0
        %1899 = vmatprep.subr.mxu0 0.0
        %1900 = vmatpush1.xpose.msra.mxu0 0.0
        %1901 = vmatprep.subr.mxu0 0.0
        %1902 = vmatpush1.xpose.msra.mxu0 0.0
        %1903 = vmatprep.subr.mxu0 0.0
        %1904 = vmatpush1.xpose.msra.mxu0 0.0
        %1905 = vmatprep.subr.mxu0 0.0
        %1906 = vmatpush1.xpose.msra.mxu0 0.0
        %1907 = vmatprep.subr.mxu0 0.0
        %1908 = vmatpush1.xpose.msra.mxu0 0.0
        %1909 = vmatprep.subr.mxu0 0.0
        %1910 = vmatpush1.xpose.msra.mxu0 0.0
        %1911 = vmatprep.subr.mxu0 0.0
        %1912 = vmatpush1.xpose.msra.mxu0 0.0
        %1913 = vmatprep.subr.mxu0 0.0
        %1914 = vmatpush1.xpose.msra.mxu0 0.0
        %1915 = vmatprep.subr.mxu0 0.0
        %1916 = vmatpush1.xpose.msra.mxu0 0.0
        %1917 = vmatprep.subr.mxu0 0.0
        %1918 = vmatpush1.xpose.msra.mxu0 0.0
        %1919 = vmatprep.subr.mxu0 0.0
        %1920 = vmatpush1.xpose.msra.mxu0 0.0
        %1921 = vmatprep.subr.mxu0 0.0
        %1922 = vmatpush1.xpose.msra.mxu0 0.0
        %1923 = vmatprep.subr.mxu0 0.0
        %1924 = vmatpush1.xpose.msra.mxu0 0.0
        %1925 = vmatprep.mubr.f32.mxu0 %v1218
        %1926 = vmatmul.mubr.f32.gmra.mrb[0].mxu0 %v1217
        %v1927 = vpop.f32.mrb[0].mxu0
        %v1928 = vadd.f32 0.0, %v1927
        %v1929 = vpop.f32.mrb[0].mxu0
        %1930 = vdwg.mxu0
        %v1931 = vld [vmem:[%s3] sm:$0xf]
        %1933 = vrot.lane.b32.xlu0 %v1931, 120
        %v1934 = vpop.permute.xlu0 %1933
        %v1935 = vsel %vm534, %v1934, 0
        %1937 = vmatprep.subr.mxu0 0.0
        %1938 = vmatpush1.msra.mxu0 %v1928
        %1939 = vmatprep.subr.mxu0 0.0
        %1940 = vmatpush1.msra.mxu0 0.0
        %1941 = vmatprep.subr.mxu0 0.0
        %1942 = vmatpush1.msra.mxu0 0.0
        %1943 = vmatprep.subr.mxu0 0.0
        %1944 = vmatpush1.msra.mxu0 0.0
        %1945 = vmatprep.subr.mxu0 0.0
        %1946 = vmatpush1.msra.mxu0 0.0
        %1947 = vmatprep.subr.mxu0 0.0
        %1948 = vmatpush1.msra.mxu0 0.0
        %1949 = vmatprep.subr.mxu0 0.0
        %1950 = vmatpush1.msra.mxu0 0.0
        %1951 = vmatprep.subr.mxu0 0.0
        %1952 = vmatpush1.msra.mxu0 0.0
        %1953 = vmatprep.subr.mxu0 0.0
        %1954 = vmatpush1.msra.mxu0 0.0
        %1955 = vmatprep.subr.mxu0 0.0
        %1956 = vmatpush1.msra.mxu0 0.0
        %1957 = vmatprep.subr.mxu0 0.0
        %1958 = vmatpush1.msra.mxu0 0.0
        %1959 = vmatprep.subr.mxu0 0.0
        %1960 = vmatpush1.msra.mxu0 0.0
        %1961 = vmatprep.subr.mxu0 0.0
        %1962 = vmatpush1.msra.mxu0 0.0
        %1963 = vmatprep.subr.mxu0 0.0
        %1964 = vmatpush1.msra.mxu0 0.0
        %1965 = vmatprep.subr.mxu0 0.0
        %1966 = vmatpush1.msra.mxu0 0.0
        %1967 = vmatprep.subr.mxu0 0.0
        %1968 = vmatpush1.msra.mxu0 0.0
        %1969 = vmatprep.subr.mxu0 0.0
        %1970 = vmatpush1.msra.mxu0 0.0
        %1971 = vmatprep.subr.mxu0 0.0
        %1972 = vmatpush1.msra.mxu0 0.0
        %1973 = vmatprep.subr.mxu0 0.0
        %1974 = vmatpush1.msra.mxu0 0.0
        %1975 = vmatprep.subr.mxu0 0.0
        %1976 = vmatpush1.msra.mxu0 0.0
        %1977 = vmatprep.subr.mxu0 0.0
        %1978 = vmatpush1.msra.mxu0 0.0
        %1979 = vmatprep.subr.mxu0 0.0
        %1980 = vmatpush1.msra.mxu0 0.0
        %1981 = vmatprep.subr.mxu0 0.0
        %1982 = vmatpush1.msra.mxu0 0.0
        %1983 = vmatprep.subr.mxu0 0.0
        %1984 = vmatpush1.msra.mxu0 0.0
        %1985 = vmatprep.subr.mxu0 0.0
        %1986 = vmatpush1.msra.mxu0 0.0
        %1987 = vmatprep.subr.mxu0 0.0
        %1988 = vmatpush1.msra.mxu0 0.0
        %1989 = vmatprep.subr.mxu0 0.0
        %1990 = vmatpush1.msra.mxu0 0.0
        %1991 = vmatprep.subr.mxu0 0.0
        %1992 = vmatpush1.msra.mxu0 0.0
        %1993 = vmatprep.subr.mxu0 0.0
        %1994 = vmatpush1.msra.mxu0 0.0
        %1995 = vmatprep.subr.mxu0 0.0
        %1996 = vmatpush1.msra.mxu0 0.0
        %1997 = vmatprep.subr.mxu0 0.0
        %1998 = vmatpush1.msra.mxu0 0.0
        %1999 = vmatprep.subr.mxu0 0.0
        %2000 = vmatpush1.msra.mxu0 0.0
        %2001 = vmatprep.mubr.f32.mxu0 0.0
        %2002 = vmatmul.mubr.f32.gmra.mrb[0].mxu0 %v1935
        %v2003 = vpop.f32.mrb[0].mxu0
        %v2004 = vadd.f32 0.0, %v2003
        %v2005 = vpop.f32.mrb[0].mxu0
        %2006 = vdwg.mxu0
        %v2008 = vsel %vm534, %v1214, 0
        %2010 = vmatprep.subr.mxu0 0.0
        %2011 = vmatpush1.msra.mxu0 %v1211
        %2012 = vmatprep.subr.mxu0 0.0
        %2013 = vmatpush1.msra.mxu0 0.0
        %2014 = vmatprep.subr.mxu0 0.0
        %2015 = vmatpush1.msra.mxu0 0.0
        %2016 = vmatprep.subr.mxu0 0.0
        %2017 = vmatpush1.msra.mxu0 0.0
        %2018 = vmatprep.subr.mxu0 0.0
        %2019 = vmatpush1.msra.mxu0 0.0
        %2020 = vmatprep.subr.mxu0 0.0
        %2021 = vmatpush1.msra.mxu0 0.0
        %2022 = vmatprep.subr.mxu0 0.0
        %2023 = vmatpush1.msra.mxu0 0.0
        %2024 = vmatprep.subr.mxu0 0.0
        %2025 = vmatpush1.msra.mxu0 0.0
        %2026 = vmatprep.subr.mxu0 0.0
        %2027 = vmatpush1.msra.mxu0 0.0
        %2028 = vmatprep.subr.mxu0 0.0
        %2029 = vmatpush1.msra.mxu0 0.0
        %2030 = vmatprep.subr.mxu0 0.0
        %2031 = vmatpush1.msra.mxu0 0.0
        %2032 = vmatprep.subr.mxu0 0.0
        %2033 = vmatpush1.msra.mxu0 0.0
        %2034 = vmatprep.subr.mxu0 0.0
        %2035 = vmatpush1.msra.mxu0 0.0
        %2036 = vmatprep.subr.mxu0 0.0
        %2037 = vmatpush1.msra.mxu0 0.0
        %2038 = vmatprep.subr.mxu0 0.0
        %2039 = vmatpush1.msra.mxu0 0.0
        %2040 = vmatprep.subr.mxu0 0.0
        %2041 = vmatpush1.msra.mxu0 0.0
        %2042 = vmatprep.subr.mxu0 0.0
        %2043 = vmatpush1.msra.mxu0 0.0
        %2044 = vmatprep.subr.mxu0 0.0
        %2045 = vmatpush1.msra.mxu0 0.0
        %2046 = vmatprep.subr.mxu0 0.0
        %2047 = vmatpush1.msra.mxu0 0.0
        %2048 = vmatprep.subr.mxu0 0.0
        %2049 = vmatpush1.msra.mxu0 0.0
        %2050 = vmatprep.subr.mxu0 0.0
        %2051 = vmatpush1.msra.mxu0 0.0
        %2052 = vmatprep.subr.mxu0 0.0
        %2053 = vmatpush1.msra.mxu0 0.0
        %2054 = vmatprep.subr.mxu0 0.0
        %2055 = vmatpush1.msra.mxu0 0.0
        %2056 = vmatprep.subr.mxu0 0.0
        %2057 = vmatpush1.msra.mxu0 0.0
        %2058 = vmatprep.subr.mxu0 0.0
        %2059 = vmatpush1.msra.mxu0 0.0
        %2060 = vmatprep.subr.mxu0 0.0
        %2061 = vmatpush1.msra.mxu0 0.0
        %2062 = vmatprep.subr.mxu0 0.0
        %2063 = vmatpush1.msra.mxu0 0.0
        %2064 = vmatprep.subr.mxu0 0.0
        %2065 = vmatpush1.msra.mxu0 0.0
        %2066 = vmatprep.subr.mxu0 0.0
        %2067 = vmatpush1.msra.mxu0 0.0
        %2068 = vmatprep.subr.mxu0 0.0
        %2069 = vmatpush1.msra.mxu0 0.0
        %2070 = vmatprep.subr.mxu0 0.0
        %2071 = vmatpush1.msra.mxu0 0.0
        %2072 = vmatprep.subr.mxu0 0.0
        %2073 = vmatpush1.msra.mxu0 0.0
        %2074 = vmatprep.mubr.f32.mxu0 0.0
        %2075 = vmatmul.mubr.f32.gmra.mrb[0].mxu0 %v2008
        %v2076 = vpop.f32.mrb[0].mxu0
        %v2077 = vadd.f32 %v2004, %v2076
        %v2078 = vpop.f32.mrb[0].mxu0
        %2079 = vdwg.mxu0
        %v2080 = vld [vmem:[%s4] sm:$0xf]
        %2082 = vset.pattern.permute.xlu0 0
        %2083 = vperm.xlu0 %2082, %v2080
        %v2084 = vpop.permute.xlu0 %2083
        %v2086 = vadd.f32 %v2077, %v2084
        %2087 = vst [vmem:[%s264] sm:$0xf] %v2086
        %s2088 = sand.u32 %s156, 1
        %s2089 = scalar_lea.sflag [#allocation4], %s2088
        %s2090 = sand.u32 %s156, 1
        %s2091 = smul.addr %s2090, 4
        %s2092 = scalar_lea.vmem [#allocation3], %s2091
        %s2093 = sand.u32 %s184, 1
        %s2094 = scalar_lea.sflag [#allocation6], %s2093
        %s2095 = sand.u32 %s184, 1
        %s2096 = smul.addr %s2095, 256
        %s2097 = scalar_lea.vmem [#allocation5], %s2096
        // Predicated region
        $region45: #{tpu_custom_call.1} parent=39 // pred_check
          %p2098 = pneg %p166
        $region46: #{tpu_custom_call.1} parent=39 // pred_check_branch
          %2100 = sbr.rel (%p2098) target = $region48
        $region47: #{tpu_custom_call.1} parent=39 // pred_region
          %s2102 = ssub.s32 64, 64
          %2103 = vsyncadd %s2089, %s2102
          %s2104 = smul.addr %s28, 2
          %s2105 = sadd.s32 %s29, %s2104
          %s2106 = smul.addr %s2105, 64
          %s2107 = scalar_lea.hbm %s5, %s2106
          %s2109 = sshll.u32 %s2092, 4
          %s2110 = int_to_ptr.vmem [resolvable:$true] %s2109
          %2112 = dma.vmem_to_hbm [thread:$0]  %s2110, 64, %s2107, %s2089
        $region48: #{tpu_custom_call.1} parent=39 // pred_fallthru
          _
        // Predicated region
        $region49: #{tpu_custom_call.1} parent=39 // pred_check
          %p2113 = pneg %p194
        $region50: #{tpu_custom_call.1} parent=39 // pred_check_branch
          %2115 = sbr.rel (%p2113) target = $region52
        $region51: #{tpu_custom_call.1} parent=39 // pred_region
          #allocation8 [shape = 'u32[6]{0}', space=smem, size = 0x18, scoped, tag = 'DMA stride descriptor']
          %s2116 = smul.u32 16, %s29
          %s2118 = ssub.s32 4096, 4096
          %2119 = vsyncadd %s2094, %s2118
          %s2120 = smul.addr %s2116, 2
          %s2121 = smul.addr %s28, 128
          %s2122 = sadd.s32 %s2120, %s2121
          %s2123 = smul.addr %s2122, 64
          %s2124 = scalar_lea.hbm %s6, %s2123
          %s2126 = sshll.u32 1, 14
          %s2127 = sxor.u32 4294967295, %s2126
          %s2130 = sshll.u32 7, 18
          %s2131 = sxor.u32 4294967295, %s2130
          %s2132 = sand.u32 0, %s2131
          %s2134 = sor.u32 %s2132, 0
          %s2136 = sshll.u32 3, 24
          %s2137 = sxor.u32 4294967295, %s2136
          %s2138 = sand.u32 %s2134, %s2137
          %s2140 = sor.u32 %s2138, 0
          %s2141 = sshll.u32 %s2097, 4
          %s2142 = int_to_ptr.vmem [resolvable:$true] %s2141
          %2148 = sst [smem:[#allocation8]] 2048
          %s2149 = scalar_lea.smem [#allocation8], 1
          %2150 = sst [smem:[%s2149]] 4096
          %s2151 = scalar_lea.smem [#allocation8], 2
          %2152 = sst [smem:[%s2151]] 16
          %s2153 = scalar_lea.smem [#allocation8], 3
          %2154 = sst [smem:[%s2153]] 128
          %s2155 = scalar_lea.smem [#allocation8], 4
          %2156 = sst [smem:[%s2155]] 128
          %s2157 = scalar_lea.smem [#allocation8], 5
          %2158 = sst [smem:[%s2157]] 8
          %2160 = dma.general %s2142, 4096, %s2124, %s2094, [#allocation7], [#allocation8], %s2140, 0
        $region52: #{tpu_custom_call.1} parent=39 // pred_fallthru
          _
      $region40: #{tpu_custom_call.1} parent=5 // pred_fallthru
        _
      %p2161 = scmp.le.s32.totalorder 2, %s19
      // Predicated region
      $region53: #{tpu_custom_call.1} parent=5 // pred_check
        %p2162 = pneg %p2161
      $region54: #{tpu_custom_call.1} parent=5 // pred_check_branch
        %2164 = sbr.rel (%p2162) target = $region56
      $region55: #{tpu_custom_call.1} parent=5 // pred_region
        %s2165 = ssub.s32 %s19, 2
        // Predicated region
        $region57: #{tpu_custom_call.1} parent=55 // pred_check
          %p2166 = pneg %p172
        $region58: #{tpu_custom_call.1} parent=55 // pred_check_branch
          %2168 = sbr.rel (%p2166) target = $region60
        $region59: #{tpu_custom_call.1} parent=55 // pred_region
          %s2169 = sand.u32 %s157, 1
          %s2170 = scalar_lea.sflag [#allocation4], %s2169
          %s2171 = sand.u32 %s157, 1
          %s2172 = smul.addr %s2171, 4
          %s2173 = scalar_lea.vmem [#allocation3], %s2172
          %2174 = dma.done %s2170, 64
        $region60: #{tpu_custom_call.1} parent=55 // pred_fallthru
          _
        // Predicated region
        $region61: #{tpu_custom_call.1} parent=55 // pred_check
          %p2175 = pneg %p200
        $region62: #{tpu_custom_call.1} parent=55 // pred_check_branch
          %2177 = sbr.rel (%p2175) target = $region64
        $region63: #{tpu_custom_call.1} parent=55 // pred_region
          %s2178 = sand.u32 %s185, 1
          %s2179 = scalar_lea.sflag [#allocation6], %s2178
          %s2180 = sand.u32 %s185, 1
          %s2181 = smul.addr %s2180, 256
          %s2182 = scalar_lea.vmem [#allocation5], %s2181
          %2183 = dma.done %s2179, 4096
        $region64: #{tpu_custom_call.1} parent=55 // pred_fallthru
          _
      $region56: #{tpu_custom_call.1} parent=5 // pred_fallthru
        _
    $region6: #{tpu_custom_call.1} parent=1 // loop_footer
      %s23 = sadd.s32 1, %s19
    $region7: #{tpu_custom_call.1} parent=1 // loop_footer_branch
      %18 = sbr.rel target = $region3
    $region8: #{tpu_custom_call.1} parent=1 // loop_exit
      _
    %2184 = vsyncpa [#allocation4], 1
    %s2185 = scalar_lea.sflag [#allocation4], 1
    %2186 = vsyncpa %s2185, 1
    %2187 = vsyncpa [#allocation6], 1
    %s2188 = scalar_lea.sflag [#allocation6], 1
    %2189 = vsyncpa %s2188, 1

</llo_original>
